<compile_context>
chip_gen: v6e
topology: v6e:2x2x1
jax: 0.10.0
libtpu: 0.0.40
codegen_flags: <defaults>
</compile_context>

<pallas_src>
import functools

import jax
import jax.numpy as jnp
import numpy as np
from jax.experimental import pallas as pl
from jax.experimental.pallas import tpu as pltpu

LANE = 128


def _ceil_to(x, m):
    return -(-x // m) * m


# ----------------------------------------------------------------------------
# Pallas kernel: conv = tap-accumulated matmuls over row-shifted views of one
# VMEM-resident activation block, with fused bias/ReLU/residual/mask epilogue.
# ----------------------------------------------------------------------------
def _conv_kernel(x_ref, w_ref, b_ref, m_ref, *rest, offs, cin_p, rows, tn, relu,
                 has_res):
    if has_res:
        r_ref, o_ref = rest
    else:
        (o_ref,) = rest
        r_ref = None

    # Accumulator initialised with the broadcast bias (saves an epilogue add).
    acc = jnp.broadcast_to(b_ref[...], (rows, tn)).astype(jnp.float32)
    for t, off in enumerate(offs):
        # Row-shifted view of the padded-flat activation = this tap's im2col
        # column, built in VMEM (never materialized in HBM).
        lhs = x_ref[pl.ds(off, rows), :].astype(jnp.bfloat16)
        w_t = w_ref[pl.ds(t * cin_p, cin_p), :]
        acc = acc + jnp.dot(lhs, w_t, preferred_element_type=jnp.float32)
    if relu:
        acc = jnp.maximum(acc, 0.0)
    if r_ref is not None:                       # fused residual add
        acc = acc + r_ref[...]
    # Mask zeroes the padding ring (and row padding) so the next conv reads a
    # correct zero-padded activation.
    o_ref[...] = (acc * m_ref[...]).astype(o_ref.dtype)


@functools.lru_cache(maxsize=None)
def _make_conv(rows_out, rows_in, cin_p, cout_p, offs, relu, has_res, tn=LANE):
    n_taps = len(offs)
    kernel = functools.partial(_conv_kernel, offs=offs, cin_p=cin_p, rows=rows_out,
                               tn=tn, relu=relu, has_res=has_res)
    in_specs = [
        pl.BlockSpec((rows_in, cin_p), lambda j: (0, 0)),       # activation (whole)
        pl.BlockSpec((n_taps * cin_p, tn), lambda j: (0, j)),   # packed bf16 weights
        pl.BlockSpec((1, tn), lambda j: (0, j)),                # bias
        pl.BlockSpec((rows_out, 1), lambda j: (0, 0)),          # valid-pixel mask
    ]
    if has_res:
        in_specs.append(pl.BlockSpec((rows_out, tn), lambda j: (0, j)))
    return pl.pallas_call(
        kernel,
        out_shape=jax.ShapeDtypeStruct((rows_out, cout_p), jnp.float32),
        grid=(cout_p // tn,),
        in_specs=in_specs,
        out_specs=pl.BlockSpec((rows_out, tn), lambda j: (0, j)),
        compiler_params=pltpu.CompilerParams(dimension_semantics=("parallel",)),
    )


# ----------------------------------------------------------------------------
# Padded-flat layout helpers (pure XLA glue, all fused under the top-level jit).
# ----------------------------------------------------------------------------
@functools.lru_cache(maxsize=None)
def _valid_mask(n, h, w):
    hp, wp = h + 2, w + 2
    m = np.zeros((n, hp, wp), np.float32)
    m[:, 1:h + 1, 1:w + 1] = 1.0
    flat = m.reshape(-1, 1)
    rows = _ceil_to(n * hp * wp, 8)
    full = np.zeros((rows, 1), np.float32)
    full[: flat.shape[0]] = flat
    return jnp.asarray(full)


def _embed(x_nhwc):
    """(N,H,W,C) -> padded-flat (rows, C) with a zero ring around each image."""
    n, h, w, c = x_nhwc.shape
    hp, wp = h + 2, w + 2
    flat = jnp.pad(x_nhwc, ((0, 0), (1, 1), (1, 1), (0, 0))).reshape(n * hp * wp, c)
    rows = _ceil_to(n * hp * wp, 8)
    return jnp.pad(flat, ((0, rows - n * hp * wp), (0, 0)))


def _extract(act, geom, c_real):
    """padded-flat (rows, >=c_real) -> (N,H,W,c_real) valid region."""
    n, h, w = geom
    hp, wp = h + 2, w + 2
    x = act[: n * hp * wp, :c_real].reshape(n, hp, wp, c_real)
    return x[:, 1:h + 1, 1:w + 1, :]


def _pixel_shuffle(x, r):
    # Matches torch.nn.PixelShuffle semantics (channel index = c*r*r + i*r + j).
    n, h, w, c = x.shape
    co = c // (r * r)
    x = x.reshape(n, h, w, co, r, r)
    x = x.transpose(0, 1, 4, 2, 5, 3)
    return x.reshape(n, h * r, w * r, co)


def conv_pf(x, wgt, bias, geom, ksize, relu=False, residual=None):
    """Conv2d (ksize in {1,3}, stride 1, 'same' padding) on a padded-flat activation."""
    n, h, w = geom
    wp = w + 2
    hp = h + 2
    rows_out = _ceil_to(n * hp * wp, 8)
    cin_real = x.shape[1]
    cin_p = _ceil_to(cin_real, LANE)
    cout_p = wgt.shape[1]
    if ksize == 3:
        offs = tuple(ky * wp + kx for ky in range(3) for kx in range(3))
    else:
        offs = (wp + 1,)
    rows_in = _ceil_to(rows_out + 2 * (wp + 1), 8)
    # Guard rows (Wp+1 on top) + zero channel padding; shifted reads stay in-bounds.
    lhs = jnp.pad(x, ((wp + 1, rows_in - rows_out - (wp + 1)),
                      (0, cin_p - cin_real)))
    mask = _valid_mask(n, h, w)
    call = _make_conv(rows_out, rows_in, cin_p, cout_p, offs, bool(relu),
                      residual is not None)
    args = [lhs, wgt, bias, mask]
    if residual is not None:
        args.append(residual)
    return call(*args)


# ----------------------------------------------------------------------------
# Parameter init: kaiming_normal weights, zero bias; pre-padded, packed, bf16.
# ----------------------------------------------------------------------------
def _conv_params(key, ksize, cin, cout):
    t = ksize * ksize
    std = float(np.sqrt(2.0 / (t * cin)))
    wr = jax.random.normal(key, (t, cin, cout), jnp.float32) * std
    cin_p, cout_p = _ceil_to(cin, LANE), _ceil_to(cout, LANE)
    w_pad = jnp.zeros((t, cin_p, cout_p), jnp.float32).at[:, :cin, :cout].set(wr)
    w_flat = w_pad.reshape(t * cin_p, cout_p).astype(jnp.bfloat16)
    b = jnp.zeros((1, cout_p), jnp.float32)
    return w_flat, b


def make_rdn(key, channels=3, scale_factor=2, D=20, C=6, G=32, G0=64):
    assert 2 <= scale_factor <= 4
    keys = iter(jax.random.split(key, 4 * D * C))

    params = {
        "sfe1": _conv_params(next(keys), 3, channels, G0),
        "sfe2": _conv_params(next(keys), 3, G0, G0),
    }
    # RDB weights stacked over D so the 20 RDBs run under one lax.scan.
    dense_w, dense_b = [], []
    for i in range(C):
        ws, bs = zip(*[_conv_params(next(keys), 3, G0 + i * G, G) for _ in range(D)])
        dense_w.append(jnp.stack(ws))
        dense_b.append(jnp.stack(bs))
    lws, lbs = zip(*[_conv_params(next(keys), 1, G0 + C * G, G0) for _ in range(D)])
    params["rdb_dense_w"] = tuple(dense_w)
    params["rdb_dense_b"] = tuple(dense_b)
    params["rdb_lff_w"] = jnp.stack(lws)
    params["rdb_lff_b"] = jnp.stack(lbs)

    params["gff1"] = _conv_params(next(keys), 1, D * G0, G0)
    params["gff2"] = _conv_params(next(keys), 3, G0, G0)

    if scale_factor % 2 == 0:
        up_factors = (2,) * (scale_factor // 2)
    else:
        up_factors = (scale_factor,)
    params["up"] = [_conv_params(next(keys), 3, G0, G0 * r * r) for r in up_factors]
    params["out"] = _conv_params(next(keys), 3, G0, channels)

    def forward(p, x_nchw):
        x = jnp.transpose(x_nchw, (0, 2, 3, 1))                   # NCHW -> NHWC
        n, h, w, _ = x.shape
        geom = (n, h, w)

        f1 = conv_pf(_embed(x), *p["sfe1"], geom, 3)              # SFE_1
        out = conv_pf(f1, *p["sfe2"], geom, 3)                    # SFE_2

        def rdb_body(carry, xs):
            dw, db, lw, lb = xs
            inp = carry
            t = carry[:, :G0]
            for i in range(C):                                    # DenseBlocks
                y = conv_pf(t, dw[i], db[i], geom, 3, relu=True)
                t = jnp.concatenate([t, y[:, :G]], axis=1)
            new = conv_pf(t, lw, lb, geom, 1, residual=inp)       # LFF + residual (fused)
            return new, new[:, :G0]

        out, feats = jax.lax.scan(
            rdb_body, out,
            (p["rdb_dense_w"], p["rdb_dense_b"], p["rdb_lff_w"], p["rdb_lff_b"]))

        cat = jnp.transpose(feats, (1, 0, 2)).reshape(feats.shape[1], D * G0)
        g = conv_pf(cat, *p["gff1"], geom, 1)                     # GFF 1x1
        g = conv_pf(g, *p["gff2"], geom, 3, residual=f1)          # GFF 3x3 + global residual

        u = g
        for (wgt, bias), r in zip(p["up"], up_factors):           # upsampling stage(s)
            c_up = G0 * r * r
            y = conv_pf(u, wgt, bias, geom, 3)
            # TODO(synk): PixelShuffle is pure data movement; left to XLA under the jit.
            shuf = _pixel_shuffle(_extract(y, geom, c_up), r)
            geom = (n, geom[1] * r, geom[2] * r)
            u = _embed(shuf)

        o = conv_pf(u, *p["out"], geom, 3)                        # OUT conv
        o = _extract(o, geom, channels)
        return jnp.transpose(o, (0, 3, 1, 2))                     # NHWC -> NCHW

    return params, jax.jit(forward)


# ----------------------------------------------------------------------------
if __name__ == "__main__":
    channels, scale_factor = 3, 2
    key = jax.random.PRNGKey(0)
    pkey, xkey = jax.random.split(key)
    params, rdn_apply = make_rdn(pkey, channels=channels, scale_factor=scale_factor)

    N, H, W = 2, 8, 8
    x = jax.random.normal(xkey, (N, channels, H, W), jnp.float32)

    # Single-layer sanity check of the fused conv kernel against lax.conv.
    x_nhwc = jnp.transpose(x, (0, 2, 3, 1))
    w_sfe, b_sfe = params["sfe1"]
    w_ref = w_sfe.astype(jnp.float32).reshape(9, LANE, LANE)[:, :channels, :64]
    w_ref = w_ref.reshape(3, 3, channels, 64)
    ref = jax.lax.conv_general_dilated(
        x_nhwc.astype(jnp.bfloat16).astype(jnp.float32), w_ref, (1, 1),
        ((1, 1), (1, 1)), dimension_numbers=("NHWC", "HWIO", "NHWC"))
    got = _extract(conv_pf(_embed(x_nhwc), w_sfe, b_sfe, (N, H, W), 3),
                   (N, H, W), 64)
    np.testing.assert_allclose(np.asarray(got), np.asarray(ref), rtol=5e-2, atol=1e-1)

    y = rdn_apply(params, x)
    jax.block_until_ready(y)

    assert y.shape == (N, channels, H * scale_factor, W * scale_factor), y.shape
    assert bool(jnp.all(jnp.isfinite(y)))
    print("KERNEL_OK")
</pallas_src>

<mosaic_0001>
module attributes {stable_mosaic.version = 11 : i64} {
  func.func @_conv_kernel(%arg0: i32, %arg1: memref<224x128xf32, #tpu.memory_space<vmem>>, %arg2: memref<1152x128xbf16, #tpu.memory_space<vmem>>, %arg3: memref<1x128xf32, #tpu.memory_space<vmem>>, %arg4: memref<200x1xf32, #tpu.memory_space<vmem>>, %arg5: memref<200x128xf32, #tpu.memory_space<vmem>>) attributes {dimension_semantics = [#tpu.dimension_semantics<parallel>], iteration_bounds = array<i64: 1>, scalar_prefetch = 0 : i64, scratch_operands = 0 : i64, tpu.core_type = #tpu.core_type<tc>, window_params = [{pipeline_mode = #tpu.pipeline_mode<synchronous>, transform_indices = @transform_0, window_bounds = array<i64: 224, 128>}, {transform_indices = @transform_1, window_bounds = array<i64: 1152, 128>}, {transform_indices = @transform_2, window_bounds = array<i64: 1, 128>}, {pipeline_mode = #tpu.pipeline_mode<synchronous>, transform_indices = @transform_3, window_bounds = array<i64: 200, 1>}, {transform_indices = @transform_4, window_bounds = array<i64: 200, 128>}]} {
    %c0 = arith.constant 0 : index
    %c0_0 = arith.constant 0 : index
    %0 = vector.load %arg3[%c0, %c0_0] : memref<1x128xf32, #tpu.memory_space<vmem>>, vector<1x128xf32>
    %1 = vector.shape_cast %0 : vector<1x128xf32> to vector<1x128xf32>
    %2 = vector.broadcast %1 : vector<1x128xf32> to vector<200x128xf32>
    %c0_1 = arith.constant 0 : index
    %c0_2 = arith.constant 0 : index
    %3 = vector.load %arg1[%c0_1, %c0_2] : memref<224x128xf32, #tpu.memory_space<vmem>>, vector<200x128xf32>
    %4 = arith.truncf %3 : vector<200x128xf32> to vector<200x128xbf16>
    %c0_3 = arith.constant 0 : index
    %c0_4 = arith.constant 0 : index
    %5 = vector.load %arg2[%c0_3, %c0_4] : memref<1152x128xbf16, #tpu.memory_space<vmem>>, vector<128x128xbf16>
    %cst = arith.constant dense<0.000000e+00> : vector<200x128xf32>
    %6 = tpu.matmul %4, %5, %cst {dimension_numbers = #tpu.dot_dimension_numbers<[1], [0], [0], [1], [0, 0, 1, 1], [], []>} : vector<200x128xbf16>, vector<128x128xbf16>, vector<200x128xf32> -> vector<200x128xf32>
    %7 = arith.addf %2, %6 : vector<200x128xf32>
    %c1 = arith.constant 1 : index
    %c0_5 = arith.constant 0 : index
    %8 = vector.load %arg1[%c1, %c0_5] : memref<224x128xf32, #tpu.memory_space<vmem>>, vector<200x128xf32>
    %9 = arith.truncf %8 : vector<200x128xf32> to vector<200x128xbf16>
    %c128 = arith.constant 128 : index
    %c0_6 = arith.constant 0 : index
    %10 = vector.load %arg2[%c128, %c0_6] : memref<1152x128xbf16, #tpu.memory_space<vmem>>, vector<128x128xbf16>
    %cst_7 = arith.constant dense<0.000000e+00> : vector<200x128xf32>
    %11 = tpu.matmul %9, %10, %cst_7 {dimension_numbers = #tpu.dot_dimension_numbers<[1], [0], [0], [1], [0, 0, 1, 1], [], []>} : vector<200x128xbf16>, vector<128x128xbf16>, vector<200x128xf32> -> vector<200x128xf32>
    %12 = arith.addf %7, %11 : vector<200x128xf32>
    %c2 = arith.constant 2 : index
    %c0_8 = arith.constant 0 : index
    %13 = vector.load %arg1[%c2, %c0_8] : memref<224x128xf32, #tpu.memory_space<vmem>>, vector<200x128xf32>
    %14 = arith.truncf %13 : vector<200x128xf32> to vector<200x128xbf16>
    %c256 = arith.constant 256 : index
    %c0_9 = arith.constant 0 : index
    %15 = vector.load %arg2[%c256, %c0_9] : memref<1152x128xbf16, #tpu.memory_space<vmem>>, vector<128x128xbf16>
    %cst_10 = arith.constant dense<0.000000e+00> : vector<200x128xf32>
    %16 = tpu.matmul %14, %15, %cst_10 {dimension_numbers = #tpu.dot_dimension_numbers<[1], [0], [0], [1], [0, 0, 1, 1], [], []>} : vector<200x128xbf16>, vector<128x128xbf16>, vector<200x128xf32> -> vector<200x128xf32>
    %17 = arith.addf %12, %16 : vector<200x128xf32>
    %c10 = arith.constant 10 : index
    %c0_11 = arith.constant 0 : index
    %18 = vector.load %arg1[%c10, %c0_11] : memref<224x128xf32, #tpu.memory_space<vmem>>, vector<200x128xf32>
    %19 = arith.truncf %18 : vector<200x128xf32> to vector<200x128xbf16>
    %c384 = arith.constant 384 : index
    %c0_12 = arith.constant 0 : index
    %20 = vector.load %arg2[%c384, %c0_12] : memref<1152x128xbf16, #tpu.memory_space<vmem>>, vector<128x128xbf16>
    %cst_13 = arith.constant dense<0.000000e+00> : vector<200x128xf32>
    %21 = tpu.matmul %19, %20, %cst_13 {dimension_numbers = #tpu.dot_dimension_numbers<[1], [0], [0], [1], [0, 0, 1, 1], [], []>} : vector<200x128xbf16>, vector<128x128xbf16>, vector<200x128xf32> -> vector<200x128xf32>
    %22 = arith.addf %17, %21 : vector<200x128xf32>
    %c11 = arith.constant 11 : index
    %c0_14 = arith.constant 0 : index
    %23 = vector.load %arg1[%c11, %c0_14] : memref<224x128xf32, #tpu.memory_space<vmem>>, vector<200x128xf32>
    %24 = arith.truncf %23 : vector<200x128xf32> to vector<200x128xbf16>
    %c512 = arith.constant 512 : index
    %c0_15 = arith.constant 0 : index
    %25 = vector.load %arg2[%c512, %c0_15] : memref<1152x128xbf16, #tpu.memory_space<vmem>>, vector<128x128xbf16>
    %cst_16 = arith.constant dense<0.000000e+00> : vector<200x128xf32>
    %26 = tpu.matmul %24, %25, %cst_16 {dimension_numbers = #tpu.dot_dimension_numbers<[1], [0], [0], [1], [0, 0, 1, 1], [], []>} : vector<200x128xbf16>, vector<128x128xbf16>, vector<200x128xf32> -> vector<200x128xf32>
    %27 = arith.addf %22, %26 : vector<200x128xf32>
    %c12 = arith.constant 12 : index
    %c0_17 = arith.constant 0 : index
    %28 = vector.load %arg1[%c12, %c0_17] : memref<224x128xf32, #tpu.memory_space<vmem>>, vector<200x128xf32>
    %29 = arith.truncf %28 : vector<200x128xf32> to vector<200x128xbf16>
    %c640 = arith.constant 640 : index
    %c0_18 = arith.constant 0 : index
    %30 = vector.load %arg2[%c640, %c0_18] : memref<1152x128xbf16, #tpu.memory_space<vmem>>, vector<128x128xbf16>
    %cst_19 = arith.constant dense<0.000000e+00> : vector<200x128xf32>
    %31 = tpu.matmul %29, %30, %cst_19 {dimension_numbers = #tpu.dot_dimension_numbers<[1], [0], [0], [1], [0, 0, 1, 1], [], []>} : vector<200x128xbf16>, vector<128x128xbf16>, vector<200x128xf32> -> vector<200x128xf32>
    %32 = arith.addf %27, %31 : vector<200x128xf32>
    %c20 = arith.constant 20 : index
    %c0_20 = arith.constant 0 : index
    %33 = vector.load %arg1[%c20, %c0_20] : memref<224x128xf32, #tpu.memory_space<vmem>>, vector<200x128xf32>
    %34 = arith.truncf %33 : vector<200x128xf32> to vector<200x128xbf16>
    %c768 = arith.constant 768 : index
    %c0_21 = arith.constant 0 : index
    %35 = vector.load %arg2[%c768, %c0_21] : memref<1152x128xbf16, #tpu.memory_space<vmem>>, vector<128x128xbf16>
    %cst_22 = arith.constant dense<0.000000e+00> : vector<200x128xf32>
    %36 = tpu.matmul %34, %35, %cst_22 {dimension_numbers = #tpu.dot_dimension_numbers<[1], [0], [0], [1], [0, 0, 1, 1], [], []>} : vector<200x128xbf16>, vector<128x128xbf16>, vector<200x128xf32> -> vector<200x128xf32>
    %37 = arith.addf %32, %36 : vector<200x128xf32>
    %c21 = arith.constant 21 : index
    %c0_23 = arith.constant 0 : index
    %38 = vector.load %arg1[%c21, %c0_23] : memref<224x128xf32, #tpu.memory_space<vmem>>, vector<200x128xf32>
    %39 = arith.truncf %38 : vector<200x128xf32> to vector<200x128xbf16>
    %c896 = arith.constant 896 : index
    %c0_24 = arith.constant 0 : index
    %40 = vector.load %arg2[%c896, %c0_24] : memref<1152x128xbf16, #tpu.memory_space<vmem>>, vector<128x128xbf16>
    %cst_25 = arith.constant dense<0.000000e+00> : vector<200x128xf32>
    %41 = tpu.matmul %39, %40, %cst_25 {dimension_numbers = #tpu.dot_dimension_numbers<[1], [0], [0], [1], [0, 0, 1, 1], [], []>} : vector<200x128xbf16>, vector<128x128xbf16>, vector<200x128xf32> -> vector<200x128xf32>
    %42 = arith.addf %37, %41 : vector<200x128xf32>
    %c22 = arith.constant 22 : index
    %c0_26 = arith.constant 0 : index
    %43 = vector.load %arg1[%c22, %c0_26] : memref<224x128xf32, #tpu.memory_space<vmem>>, vector<200x128xf32>
    %44 = arith.truncf %43 : vector<200x128xf32> to vector<200x128xbf16>
    %c1024 = arith.constant 1024 : index
    %c0_27 = arith.constant 0 : index
    %45 = vector.load %arg2[%c1024, %c0_27] : memref<1152x128xbf16, #tpu.memory_space<vmem>>, vector<128x128xbf16>
    %cst_28 = arith.constant dense<0.000000e+00> : vector<200x128xf32>
    %46 = tpu.matmul %44, %45, %cst_28 {dimension_numbers = #tpu.dot_dimension_numbers<[1], [0], [0], [1], [0, 0, 1, 1], [], []>} : vector<200x128xbf16>, vector<128x128xbf16>, vector<200x128xf32> -> vector<200x128xf32>
    %47 = arith.addf %42, %46 : vector<200x128xf32>
    %c0_29 = arith.constant 0 : index
    %c0_30 = arith.constant 0 : index
    %48 = vector.load %arg4[%c0_29, %c0_30] : memref<200x1xf32, #tpu.memory_space<vmem>>, vector<200x1xf32>
    %49 = vector.broadcast %48 : vector<200x1xf32> to vector<200x128xf32>
    %50 = arith.mulf %47, %49 : vector<200x128xf32>
    %c0_31 = arith.constant 0 : index
    %c0_32 = arith.constant 0 : index
    %51 = vector.load %arg5[%c0_31, %c0_32] : memref<200x128xf32, #tpu.memory_space<vmem>>, vector<200x128xf32>
    tpu.vector_store %arg5[%c0_31, %c0_32], %50 {strides = array<i32>} : memref<200x128xf32, #tpu.memory_space<vmem>>, vector<200x128xf32>,
    return
  }
  func.func @transform_0(%arg0: i32) -> (i32, i32) {
    %c0_i32 = arith.constant 0 : i32
    %c0_i32_0 = arith.constant 0 : i32
    %c0_i32_1 = arith.constant 0 : i32
    return %c0_i32, %c0_i32_0 : i32, i32
  }
  func.func @transform_1(%arg0: i32) -> (i32, i32) {
    %c0_i32 = arith.constant 0 : i32
    %c0_i32_0 = arith.constant 0 : i32
    return %c0_i32, %arg0 : i32, i32
  }
  func.func @transform_2(%arg0: i32) -> (i32, i32) {
    %c0_i32 = arith.constant 0 : i32
    %c0_i32_0 = arith.constant 0 : i32
    return %c0_i32, %arg0 : i32, i32
  }
  func.func @transform_3(%arg0: i32) -> (i32, i32) {
    %c0_i32 = arith.constant 0 : i32
    %c0_i32_0 = arith.constant 0 : i32
    %c0_i32_1 = arith.constant 0 : i32
    return %c0_i32, %c0_i32_0 : i32, i32
  }
  func.func @transform_4(%arg0: i32) -> (i32, i32) {
    %c0_i32 = arith.constant 0 : i32
    %c0_i32_0 = arith.constant 0 : i32
    return %c0_i32, %arg0 : i32, i32
  }
}

</mosaic_0001>

<llo_original>
// kernel: tpu_custom_call.1
$region0: #{tpu_custom_call.1}
  #allocation0 [shape = 'u32[]', space=smem, size = 0x4, offset = 0x4, fixed_abs, tag = 'smem constant byte address 0x4 - core index']
  #allocation1 [shape = 'u32[144,128]{1,0:T(1,128)}', space=vmem, size = 0x12000, scoped, tag = 'internal scratch']
  %s0 = inlined_call_operand.hbm [shape: f32[224,128], index: 0, kind: input, shape index: {}]
  %s1 = inlined_call_operand.hbm [shape: bf16[1152,128], index: 1, kind: input, shape index: {}]
  %s2 = inlined_call_operand.vmem [shape: f32[1,128], index: 2, kind: input, shape index: {}]
  %s3 = inlined_call_operand.vmem [shape: f32[200,1], index: 3, kind: input, shape index: {}]
  %s4 = inlined_call_operand.hbm [shape: f32[200,128], index: 4, kind: output, shape index: {}]
  %s5 = sld [smem:[#allocation0]]
  $region34: #{tpu_custom_call.1} parent=0
    _
  %s7 = ssub.s32 1, %s5
  %s8 = scalar_select 0, %s7, %s5
  $region1: #{tpu_custom_call.1} parent=0
    #allocation2 [shape = 'u8[114688]{0}', space=vmem, size = 0x1c000, scoped, tag = 'input window, operand 0, single buffered']
    #allocation3 [shape = 's32[1]{0}', space=sflag, size = 0x4, scoped, tag = 'scoped memory for tpu_custom_call.1']
    #allocation4 [shape = 's32[1]{0}', space=sflag, size = 0x4, scoped, tag = 'scoped memory for tpu_custom_call.1']
    #allocation5 [shape = 'u8[294912]{0}', space=vmem, size = 0x48000, scoped, tag = 'input window, operand 1, single buffered']
    #allocation6 [shape = 's32[1]{0}', space=sflag, size = 0x4, scoped, tag = 'scoped memory for tpu_custom_call.1']
    #allocation7 [shape = 'u8[102400]{0}', space=vmem, size = 0x19000, scoped, tag = 'output window, operand 0, single buffered']
    %9 = vsyncpa [#allocation3], 0
    %10 = vsyncpa [#allocation6], 0
    %11 = vsyncpa [#allocation4], 0
    // Predicated region
    $region2: #{tpu_custom_call.1} parent=1 // pred_check
      _
    $region3: #{tpu_custom_call.1} parent=1 // pred_check_branch
      %13 = sbr.rel (0) target = $region5
    $region4: #{tpu_custom_call.1} parent=1 // pred_region
      %s15 = ssub.s32 3584, 3584
      %16 = vsyncadd [#allocation3], %s15
      %s17 = sshll.u32 [#allocation2], 4
      %s18 = int_to_ptr.vmem [resolvable:$true] %s17
      %23 = dma.hbm_to_vmem [thread:$0]  %s0, 3584, %s18, [#allocation3], 128, 128, 8
    $region5: #{tpu_custom_call.1} parent=1 // pred_fallthru
      _
    // Predicated region
    $region6: #{tpu_custom_call.1} parent=1 // pred_check
      _
    $region7: #{tpu_custom_call.1} parent=1 // pred_check_branch
      %25 = sbr.rel (0) target = $region9
    $region8: #{tpu_custom_call.1} parent=1 // pred_region
      %s27 = ssub.s32 9216, 9216
      %28 = vsyncadd [#allocation6], %s27
      %s29 = sshll.u32 [#allocation5], 4
      %s30 = int_to_ptr.vmem [resolvable:$true] %s29
      %35 = dma.hbm_to_vmem [thread:$0]  %s1, 9216, %s30, [#allocation6], 64, 64, 4
    $region9: #{tpu_custom_call.1} parent=1 // pred_fallthru
      _
    // Predicated region
    $region10: #{tpu_custom_call.1} parent=1 // pred_check
      _
    $region11: #{tpu_custom_call.1} parent=1 // pred_check_branch
      %37 = sbr.rel (0) target = $region13
    $region12: #{tpu_custom_call.1} parent=1 // pred_region
      _
    $region13: #{tpu_custom_call.1} parent=1 // pred_fallthru
      _
    // Predicated region
    $region14: #{tpu_custom_call.1} parent=1 // pred_check
      _
    $region15: #{tpu_custom_call.1} parent=1 // pred_check_branch
      %39 = sbr.rel (0) target = $region17
    $region16: #{tpu_custom_call.1} parent=1 // pred_region
      _
    $region17: #{tpu_custom_call.1} parent=1 // pred_fallthru
      _
    // Predicated region
    $region18: #{tpu_custom_call.1} parent=1 // pred_check
      _
    $region19: #{tpu_custom_call.1} parent=1 // pred_check_branch
      %41 = sbr.rel (0) target = $region21
    $region20: #{tpu_custom_call.1} parent=1 // pred_region
      %42 = dma.done [#allocation3], 3584
    $region21: #{tpu_custom_call.1} parent=1 // pred_fallthru
      _
    // Predicated region
    $region22: #{tpu_custom_call.1} parent=1 // pred_check
      _
    $region23: #{tpu_custom_call.1} parent=1 // pred_check_branch
      %44 = sbr.rel (0) target = $region25
    $region24: #{tpu_custom_call.1} parent=1 // pred_region
      %45 = dma.done [#allocation6], 9216
    $region25: #{tpu_custom_call.1} parent=1 // pred_fallthru
      _
    %v47 = vld [vmem:[%s2] sm:$0x1]
    %v49 = vlaneseq
    %v50 = vshrl.u32 %v49, 7
    %v51 = vsub.s32 0, %v50
    %v52 = vrot.slane %v47, %v51
    %v54 = vld [vmem:[#allocation2] sm:$0xff]
    %v55 = vld [vmem:[#allocation2 + $0x8] sm:$0xff]
    %v56 = vld [vmem:[#allocation2 + $0x10] sm:$0xff]
    %v57 = vld [vmem:[#allocation2 + $0x18] sm:$0xff]
    %v58 = vld [vmem:[#allocation2 + $0x20] sm:$0xff]
    %v59 = vld [vmem:[#allocation2 + $0x28] sm:$0xff]
    %v60 = vld [vmem:[#allocation2 + $0x30] sm:$0xff]
    %v61 = vld [vmem:[#allocation2 + $0x38] sm:$0xff]
    %v62 = vld [vmem:[#allocation2 + $0x40] sm:$0xff]
    %v63 = vld [vmem:[#allocation2 + $0x48] sm:$0xff]
    %v64 = vld [vmem:[#allocation2 + $0x50] sm:$0xff]
    %v65 = vld [vmem:[#allocation2 + $0x58] sm:$0xff]
    %v66 = vld [vmem:[#allocation2 + $0x60] sm:$0xff]
    %v67 = vld [vmem:[#allocation2 + $0x68] sm:$0xff]
    %v68 = vld [vmem:[#allocation2 + $0x70] sm:$0xff]
    %v69 = vld [vmem:[#allocation2 + $0x78] sm:$0xff]
    %v70 = vld [vmem:[#allocation2 + $0x80] sm:$0xff]
    %v71 = vld [vmem:[#allocation2 + $0x88] sm:$0xff]
    %v72 = vld [vmem:[#allocation2 + $0x90] sm:$0xff]
    %v73 = vld [vmem:[#allocation2 + $0x98] sm:$0xff]
    %v74 = vld [vmem:[#allocation2 + $0xa0] sm:$0xff]
    %v75 = vld [vmem:[#allocation2 + $0xa8] sm:$0xff]
    %v76 = vld [vmem:[#allocation2 + $0xb0] sm:$0xff]
    %v77 = vld [vmem:[#allocation2 + $0xb8] sm:$0xff]
    %v78 = vld [vmem:[#allocation2 + $0xc0] sm:$0xff]
    %v79 = vpack.c.bf16 %v55, %v54
    %v80 = vpack.c.bf16 %v57, %v56
    %v81 = vpack.c.bf16 %v59, %v58
    %v82 = vpack.c.bf16 %v61, %v60
    %v83 = vpack.c.bf16 %v63, %v62
    %v84 = vpack.c.bf16 %v65, %v64
    %v85 = vpack.c.bf16 %v67, %v66
    %v86 = vpack.c.bf16 %v69, %v68
    %v87 = vpack.c.bf16 %v71, %v70
    %v88 = vpack.c.bf16 %v73, %v72
    %v89 = vpack.c.bf16 %v75, %v74
    %v90 = vpack.c.bf16 %v77, %v76
    %v91 = vpack.c.bf16 %v78, %v78
    %v92 = vld [vmem:[#allocation5] sm:$0xf]
    %v93 = vld [vmem:[#allocation5 + $0x4] sm:$0xf]
    %v94 = vld [vmem:[#allocation5 + $0x8] sm:$0xf]
    %v95 = vld [vmem:[#allocation5 + $0xc] sm:$0xf]
    %v96 = vld [vmem:[#allocation5 + $0x10] sm:$0xf]
    %v97 = vld [vmem:[#allocation5 + $0x14] sm:$0xf]
    %v98 = vld [vmem:[#allocation5 + $0x18] sm:$0xf]
    %v99 = vld [vmem:[#allocation5 + $0x1c] sm:$0xf]
    %v100 = vld [vmem:[#allocation5 + $0x20] sm:$0xf]
    %v101 = vld [vmem:[#allocation5 + $0x24] sm:$0xf]
    %v102 = vld [vmem:[#allocation5 + $0x28] sm:$0xf]
    %v103 = vld [vmem:[#allocation5 + $0x2c] sm:$0xf]
    %v104 = vld [vmem:[#allocation5 + $0x30] sm:$0xf]
    %v105 = vld [vmem:[#allocation5 + $0x34] sm:$0xf]
    %v106 = vld [vmem:[#allocation5 + $0x38] sm:$0xf]
    %v107 = vld [vmem:[#allocation5 + $0x3c] sm:$0xf]
    %v124 = vunpack.c.l.b16 %v92
    %v125 = vunpack.c.l.b16 %v93
    %v126 = vunpack.c.l.b16 %v94
    %v127 = vunpack.c.l.b16 %v95
    %v128 = vunpack.c.l.b16 %v96
    %v129 = vunpack.c.l.b16 %v97
    %v130 = vunpack.c.l.b16 %v98
    %v131 = vunpack.c.l.b16 %v99
    %v132 = vunpack.c.l.b16 %v100
    %v133 = vunpack.c.l.b16 %v101
    %v134 = vunpack.c.l.b16 %v102
    %v135 = vunpack.c.l.b16 %v103
    %v136 = vunpack.c.l.b16 %v104
    %v137 = vunpack.c.l.b16 %v105
    %v138 = vunpack.c.l.b16 %v106
    %v139 = vunpack.c.l.b16 %v107
    %v140 = vpack.c.b16 %v125, %v124
    %v141 = vpack.c.b16 %v127, %v126
    %v142 = vpack.c.b16 %v129, %v128
    %v143 = vpack.c.b16 %v131, %v130
    %v144 = vpack.c.b16 %v133, %v132
    %v145 = vpack.c.b16 %v135, %v134
    %v146 = vpack.c.b16 %v137, %v136
    %v147 = vpack.c.b16 %v139, %v138
    %156 = vmatprep.subr.bf16.mxu0 0
    %157 = vmatpush1.bf16.msra.mxu0 %v147
    %158 = vmatprep.subr.bf16.mxu0 0
    %159 = vmatpush1.bf16.msra.mxu0 %v146
    %160 = vmatprep.subr.bf16.mxu0 0
    %161 = vmatpush1.bf16.msra.mxu0 %v145
    %162 = vmatprep.subr.bf16.mxu0 0
    %163 = vmatpush1.bf16.msra.mxu0 %v144
    %164 = vmatprep.subr.bf16.mxu0 0
    %165 = vmatpush1.bf16.msra.mxu0 %v143
    %166 = vmatprep.subr.bf16.mxu0 0
    %167 = vmatpush1.bf16.msra.mxu0 %v142
    %168 = vmatprep.subr.bf16.mxu0 0
    %169 = vmatpush1.bf16.msra.mxu0 %v141
    %170 = vmatprep.subr.bf16.mxu0 0
    %171 = vmatpush1.bf16.msra.mxu0 %v140
    %172 = vmatprep.subr.bf16.mxu0 0
    %173 = vmatpush2.bf16.msra.mxu0 0
    %174 = vmatprep.subr.bf16.mxu0 0
    %175 = vmatpush2.bf16.msra.mxu0 0
    %176 = vmatprep.subr.bf16.mxu0 0
    %177 = vmatpush2.bf16.msra.mxu0 0
    %178 = vmatprep.subr.bf16.mxu0 0
    %179 = vmatpush2.bf16.msra.mxu0 0
    %180 = vmatprep.subr.bf16.mxu0 0
    %181 = vmatpush2.bf16.msra.mxu0 0
    %182 = vmatprep.subr.bf16.mxu0 0
    %183 = vmatpush2.bf16.msra.mxu0 0
    %184 = vmatprep.subr.bf16.mxu0 0
    %185 = vmatpush2.bf16.msra.mxu0 0
    %186 = vmatprep.subr.bf16.mxu0 0
    %187 = vmatpush2.bf16.msra.mxu0 0
    %188 = vmatprep.mubr.bf16.mxu0 0
    %189 = vmatmul.mubr.bf16.gmra.mxu0 %v79
    %v190 = vpop.f32.mrf.mxu0
    %v191 = vadd.f32 0.0, %v190
    %v192 = vpop.f32.mrf.mxu0
    %v193 = vpop.f32.mrf.mxu0
    %v194 = vadd.f32 0.0, %v193
    %v195 = vpop.f32.mrf.mxu0
    %196 = vmatprep.mubr.bf16.mxu0 0
    %197 = vmatmul.mubr.bf16.gmra.mxu0 %v80
    %v198 = vpop.f32.mrf.mxu0
    %v199 = vadd.f32 0.0, %v198
    %v200 = vpop.f32.mrf.mxu0
    %v201 = vpop.f32.mrf.mxu0
    %v202 = vadd.f32 0.0, %v201
    %v203 = vpop.f32.mrf.mxu0
    %204 = vmatprep.mubr.bf16.mxu0 0
    %205 = vmatmul.mubr.bf16.gmra.mxu0 %v81
    %v206 = vpop.f32.mrf.mxu0
    %v207 = vadd.f32 0.0, %v206
    %v208 = vpop.f32.mrf.mxu0
    %v209 = vpop.f32.mrf.mxu0
    %v210 = vadd.f32 0.0, %v209
    %v211 = vpop.f32.mrf.mxu0
    %212 = vmatprep.mubr.bf16.mxu0 0
    %213 = vmatmul.mubr.bf16.gmra.mxu0 %v82
    %v214 = vpop.f32.mrf.mxu0
    %v215 = vadd.f32 0.0, %v214
    %v216 = vpop.f32.mrf.mxu0
    %v217 = vpop.f32.mrf.mxu0
    %v218 = vadd.f32 0.0, %v217
    %v219 = vpop.f32.mrf.mxu0
    %220 = vmatprep.mubr.bf16.mxu0 0
    %221 = vmatmul.mubr.bf16.gmra.mxu0 %v83
    %v222 = vpop.f32.mrf.mxu0
    %v223 = vadd.f32 0.0, %v222
    %v224 = vpop.f32.mrf.mxu0
    %v225 = vpop.f32.mrf.mxu0
    %v226 = vadd.f32 0.0, %v225
    %v227 = vpop.f32.mrf.mxu0
    %228 = vmatprep.mubr.bf16.mxu0 0
    %229 = vmatmul.mubr.bf16.gmra.mxu0 %v84
    %v230 = vpop.f32.mrf.mxu0
    %v231 = vadd.f32 0.0, %v230
    %v232 = vpop.f32.mrf.mxu0
    %v233 = vpop.f32.mrf.mxu0
    %v234 = vadd.f32 0.0, %v233
    %v235 = vpop.f32.mrf.mxu0
    %236 = vmatprep.mubr.bf16.mxu0 0
    %237 = vmatmul.mubr.bf16.gmra.mxu0 %v85
    %v238 = vpop.f32.mrf.mxu0
    %v239 = vadd.f32 0.0, %v238
    %v240 = vpop.f32.mrf.mxu0
    %v241 = vpop.f32.mrf.mxu0
    %v242 = vadd.f32 0.0, %v241
    %v243 = vpop.f32.mrf.mxu0
    %244 = vmatprep.mubr.bf16.mxu0 0
    %245 = vmatmul.mubr.bf16.gmra.mxu0 %v86
    %v246 = vpop.f32.mrf.mxu0
    %v247 = vadd.f32 0.0, %v246
    %v248 = vpop.f32.mrf.mxu0
    %v249 = vpop.f32.mrf.mxu0
    %v250 = vadd.f32 0.0, %v249
    %v251 = vpop.f32.mrf.mxu0
    %252 = vmatprep.mubr.bf16.mxu0 0
    %253 = vmatmul.mubr.bf16.gmra.mxu0 %v87
    %v254 = vpop.f32.mrf.mxu0
    %v255 = vadd.f32 0.0, %v254
    %v256 = vpop.f32.mrf.mxu0
    %v257 = vpop.f32.mrf.mxu0
    %v258 = vadd.f32 0.0, %v257
    %v259 = vpop.f32.mrf.mxu0
    %260 = vmatprep.mubr.bf16.mxu0 0
    %261 = vmatmul.mubr.bf16.gmra.mxu0 %v88
    %v262 = vpop.f32.mrf.mxu0
    %v263 = vadd.f32 0.0, %v262
    %v264 = vpop.f32.mrf.mxu0
    %v265 = vpop.f32.mrf.mxu0
    %v266 = vadd.f32 0.0, %v265
    %v267 = vpop.f32.mrf.mxu0
    %268 = vmatprep.mubr.bf16.mxu0 0
    %269 = vmatmul.mubr.bf16.gmra.mxu0 %v89
    %v270 = vpop.f32.mrf.mxu0
    %v271 = vadd.f32 0.0, %v270
    %v272 = vpop.f32.mrf.mxu0
    %v273 = vpop.f32.mrf.mxu0
    %v274 = vadd.f32 0.0, %v273
    %v275 = vpop.f32.mrf.mxu0
    %276 = vmatprep.mubr.bf16.mxu0 0
    %277 = vmatmul.mubr.bf16.gmra.mxu0 %v90
    %v278 = vpop.f32.mrf.mxu0
    %v279 = vadd.f32 0.0, %v278
    %v280 = vpop.f32.mrf.mxu0
    %v281 = vpop.f32.mrf.mxu0
    %v282 = vadd.f32 0.0, %v281
    %v283 = vpop.f32.mrf.mxu0
    %284 = vmatprep.mubr.bf16.mxu0 0
    %285 = vmatmul.mubr.bf16.gmra.mxu0 %v91
    %v286 = vpop.f32.mrf.mxu0
    %v287 = vadd.f32 0.0, %v286
    %v288 = vpop.f32.mrf.mxu0
    %v289 = vpop.f32.mrf.mxu0
    %v290 = vpop.f32.mrf.mxu0
    %291 = vdwg.mxu0
    %v292 = vadd.f32 %v52, %v191
    %v293 = vadd.f32 %v52, %v194
    %v294 = vadd.f32 %v52, %v199
    %v295 = vadd.f32 %v52, %v202
    %v296 = vadd.f32 %v52, %v207
    %v297 = vadd.f32 %v52, %v210
    %v298 = vadd.f32 %v52, %v215
    %v299 = vadd.f32 %v52, %v218
    %v300 = vadd.f32 %v52, %v223
    %v301 = vadd.f32 %v52, %v226
    %v302 = vadd.f32 %v52, %v231
    %v303 = vadd.f32 %v52, %v234
    %v304 = vadd.f32 %v52, %v239
    %v305 = vadd.f32 %v52, %v242
    %v306 = vadd.f32 %v52, %v247
    %v307 = vadd.f32 %v52, %v250
    %v308 = vadd.f32 %v52, %v255
    %v309 = vadd.f32 %v52, %v258
    %v310 = vadd.f32 %v52, %v263
    %v311 = vadd.f32 %v52, %v266
    %v312 = vadd.f32 %v52, %v271
    %v313 = vadd.f32 %v52, %v274
    %v314 = vadd.f32 %v52, %v279
    %v315 = vadd.f32 %v52, %v282
    %v316 = vadd.f32 %v52, %v287
    %v317 = vld [vmem:[#allocation2 + $0x1] sm:$0xff]
    %v318 = vld [vmem:[#allocation2 + $0x9] sm:$0xff]
    %v319 = vld [vmem:[#allocation2 + $0x11] sm:$0xff]
    %v320 = vld [vmem:[#allocation2 + $0x19] sm:$0xff]
    %v321 = vld [vmem:[#allocation2 + $0x21] sm:$0xff]
    %v322 = vld [vmem:[#allocation2 + $0x29] sm:$0xff]
    %v323 = vld [vmem:[#allocation2 + $0x31] sm:$0xff]
    %v324 = vld [vmem:[#allocation2 + $0x39] sm:$0xff]
    %v325 = vld [vmem:[#allocation2 + $0x41] sm:$0xff]
    %v326 = vld [vmem:[#allocation2 + $0x49] sm:$0xff]
    %v327 = vld [vmem:[#allocation2 + $0x51] sm:$0xff]
    %v328 = vld [vmem:[#allocation2 + $0x59] sm:$0xff]
    %v329 = vld [vmem:[#allocation2 + $0x61] sm:$0xff]
    %v330 = vld [vmem:[#allocation2 + $0x69] sm:$0xff]
    %v331 = vld [vmem:[#allocation2 + $0x71] sm:$0xff]
    %v332 = vld [vmem:[#allocation2 + $0x79] sm:$0xff]
    %v333 = vld [vmem:[#allocation2 + $0x81] sm:$0xff]
    %v334 = vld [vmem:[#allocation2 + $0x89] sm:$0xff]
    %v335 = vld [vmem:[#allocation2 + $0x91] sm:$0xff]
    %v336 = vld [vmem:[#allocation2 + $0x99] sm:$0xff]
    %v337 = vld [vmem:[#allocation2 + $0xa1] sm:$0xff]
    %v338 = vld [vmem:[#allocation2 + $0xa9] sm:$0xff]
    %v339 = vld [vmem:[#allocation2 + $0xb1] sm:$0xff]
    %v340 = vld [vmem:[#allocation2 + $0xb9] sm:$0xff]
    %v341 = vld [vmem:[#allocation2 + $0xc1] sm:$0xff]
    %v342 = vpack.c.bf16 %v318, %v317
    %v343 = vpack.c.bf16 %v320, %v319
    %v344 = vpack.c.bf16 %v322, %v321
    %v345 = vpack.c.bf16 %v324, %v323
    %v346 = vpack.c.bf16 %v326, %v325
    %v347 = vpack.c.bf16 %v328, %v327
    %v348 = vpack.c.bf16 %v330, %v329
    %v349 = vpack.c.bf16 %v332, %v331
    %v350 = vpack.c.bf16 %v334, %v333
    %v351 = vpack.c.bf16 %v336, %v335
    %v352 = vpack.c.bf16 %v338, %v337
    %v353 = vpack.c.bf16 %v340, %v339
    %v354 = vpack.c.bf16 %v341, %v341
    %v355 = vld [vmem:[#allocation5 + $0x40] sm:$0xf]
    %v356 = vld [vmem:[#allocation5 + $0x44] sm:$0xf]
    %v357 = vld [vmem:[#allocation5 + $0x48] sm:$0xf]
    %v358 = vld [vmem:[#allocation5 + $0x4c] sm:$0xf]
    %v359 = vld [vmem:[#allocation5 + $0x50] sm:$0xf]
    %v360 = vld [vmem:[#allocation5 + $0x54] sm:$0xf]
    %v361 = vld [vmem:[#allocation5 + $0x58] sm:$0xf]
    %v362 = vld [vmem:[#allocation5 + $0x5c] sm:$0xf]
    %v363 = vld [vmem:[#allocation5 + $0x60] sm:$0xf]
    %v364 = vld [vmem:[#allocation5 + $0x64] sm:$0xf]
    %v365 = vld [vmem:[#allocation5 + $0x68] sm:$0xf]
    %v366 = vld [vmem:[#allocation5 + $0x6c] sm:$0xf]
    %v367 = vld [vmem:[#allocation5 + $0x70] sm:$0xf]
    %v368 = vld [vmem:[#allocation5 + $0x74] sm:$0xf]
    %v369 = vld [vmem:[#allocation5 + $0x78] sm:$0xf]
    %v370 = vld [vmem:[#allocation5 + $0x7c] sm:$0xf]
    %v387 = vunpack.c.l.b16 %v355
    %v388 = vunpack.c.l.b16 %v356
    %v389 = vunpack.c.l.b16 %v357
    %v390 = vunpack.c.l.b16 %v358
    %v391 = vunpack.c.l.b16 %v359
    %v392 = vunpack.c.l.b16 %v360
    %v393 = vunpack.c.l.b16 %v361
    %v394 = vunpack.c.l.b16 %v362
    %v395 = vunpack.c.l.b16 %v363
    %v396 = vunpack.c.l.b16 %v364
    %v397 = vunpack.c.l.b16 %v365
    %v398 = vunpack.c.l.b16 %v366
    %v399 = vunpack.c.l.b16 %v367
    %v400 = vunpack.c.l.b16 %v368
    %v401 = vunpack.c.l.b16 %v369
    %v402 = vunpack.c.l.b16 %v370
    %v403 = vpack.c.b16 %v388, %v387
    %v404 = vpack.c.b16 %v390, %v389
    %v405 = vpack.c.b16 %v392, %v391
    %v406 = vpack.c.b16 %v394, %v393
    %v407 = vpack.c.b16 %v396, %v395
    %v408 = vpack.c.b16 %v398, %v397
    %v409 = vpack.c.b16 %v400, %v399
    %v410 = vpack.c.b16 %v402, %v401
    %419 = vmatprep.subr.bf16.mxu0 0
    %420 = vmatpush1.bf16.msra.mxu0 %v410
    %421 = vmatprep.subr.bf16.mxu0 0
    %422 = vmatpush1.bf16.msra.mxu0 %v409
    %423 = vmatprep.subr.bf16.mxu0 0
    %424 = vmatpush1.bf16.msra.mxu0 %v408
    %425 = vmatprep.subr.bf16.mxu0 0
    %426 = vmatpush1.bf16.msra.mxu0 %v407
    %427 = vmatprep.subr.bf16.mxu0 0
    %428 = vmatpush1.bf16.msra.mxu0 %v406
    %429 = vmatprep.subr.bf16.mxu0 0
    %430 = vmatpush1.bf16.msra.mxu0 %v405
    %431 = vmatprep.subr.bf16.mxu0 0
    %432 = vmatpush1.bf16.msra.mxu0 %v404
    %433 = vmatprep.subr.bf16.mxu0 0
    %434 = vmatpush1.bf16.msra.mxu0 %v403
    %435 = vmatprep.subr.bf16.mxu0 0
    %436 = vmatpush2.bf16.msra.mxu0 0
    %437 = vmatprep.subr.bf16.mxu0 0
    %438 = vmatpush2.bf16.msra.mxu0 0
    %439 = vmatprep.subr.bf16.mxu0 0
    %440 = vmatpush2.bf16.msra.mxu0 0
    %441 = vmatprep.subr.bf16.mxu0 0
    %442 = vmatpush2.bf16.msra.mxu0 0
    %443 = vmatprep.subr.bf16.mxu0 0
    %444 = vmatpush2.bf16.msra.mxu0 0
    %445 = vmatprep.subr.bf16.mxu0 0
    %446 = vmatpush2.bf16.msra.mxu0 0
    %447 = vmatprep.subr.bf16.mxu0 0
    %448 = vmatpush2.bf16.msra.mxu0 0
    %449 = vmatprep.subr.bf16.mxu0 0
    %450 = vmatpush2.bf16.msra.mxu0 0
    %451 = vmatprep.mubr.bf16.mxu0 0
    %452 = vmatmul.mubr.bf16.gmra.mxu0 %v342
    %v453 = vpop.f32.mrf.mxu0
    %v454 = vadd.f32 0.0, %v453
    %v455 = vpop.f32.mrf.mxu0
    %v456 = vpop.f32.mrf.mxu0
    %v457 = vadd.f32 0.0, %v456
    %v458 = vpop.f32.mrf.mxu0
    %459 = vmatprep.mubr.bf16.mxu0 0
    %460 = vmatmul.mubr.bf16.gmra.mxu0 %v343
    %v461 = vpop.f32.mrf.mxu0
    %v462 = vadd.f32 0.0, %v461
    %v463 = vpop.f32.mrf.mxu0
    %v464 = vpop.f32.mrf.mxu0
    %v465 = vadd.f32 0.0, %v464
    %v466 = vpop.f32.mrf.mxu0
    %467 = vmatprep.mubr.bf16.mxu0 0
    %468 = vmatmul.mubr.bf16.gmra.mxu0 %v344
    %v469 = vpop.f32.mrf.mxu0
    %v470 = vadd.f32 0.0, %v469
    %v471 = vpop.f32.mrf.mxu0
    %v472 = vpop.f32.mrf.mxu0
    %v473 = vadd.f32 0.0, %v472
    %v474 = vpop.f32.mrf.mxu0
    %475 = vmatprep.mubr.bf16.mxu0 0
    %476 = vmatmul.mubr.bf16.gmra.mxu0 %v345
    %v477 = vpop.f32.mrf.mxu0
    %v478 = vadd.f32 0.0, %v477
    %v479 = vpop.f32.mrf.mxu0
    %v480 = vpop.f32.mrf.mxu0
    %v481 = vadd.f32 0.0, %v480
    %v482 = vpop.f32.mrf.mxu0
    %483 = vmatprep.mubr.bf16.mxu0 0
    %484 = vmatmul.mubr.bf16.gmra.mxu0 %v346
    %v485 = vpop.f32.mrf.mxu0
    %v486 = vadd.f32 0.0, %v485
    %v487 = vpop.f32.mrf.mxu0
    %v488 = vpop.f32.mrf.mxu0
    %v489 = vadd.f32 0.0, %v488
    %v490 = vpop.f32.mrf.mxu0
    %491 = vmatprep.mubr.bf16.mxu0 0
    %492 = vmatmul.mubr.bf16.gmra.mxu0 %v347
    %v493 = vpop.f32.mrf.mxu0
    %v494 = vadd.f32 0.0, %v493
    %v495 = vpop.f32.mrf.mxu0
    %v496 = vpop.f32.mrf.mxu0
    %v497 = vadd.f32 0.0, %v496
    %v498 = vpop.f32.mrf.mxu0
    %499 = vmatprep.mubr.bf16.mxu0 0
    %500 = vmatmul.mubr.bf16.gmra.mxu0 %v348
    %v501 = vpop.f32.mrf.mxu0
    %v502 = vadd.f32 0.0, %v501
    %v503 = vpop.f32.mrf.mxu0
    %v504 = vpop.f32.mrf.mxu0
    %v505 = vadd.f32 0.0, %v504
    %v506 = vpop.f32.mrf.mxu0
    %507 = vmatprep.mubr.bf16.mxu0 0
    %508 = vmatmul.mubr.bf16.gmra.mxu0 %v349
    %v509 = vpop.f32.mrf.mxu0
    %v510 = vadd.f32 0.0, %v509
    %v511 = vpop.f32.mrf.mxu0
    %v512 = vpop.f32.mrf.mxu0
    %v513 = vadd.f32 0.0, %v512
    %v514 = vpop.f32.mrf.mxu0
    %515 = vmatprep.mubr.bf16.mxu0 0
    %516 = vmatmul.mubr.bf16.gmra.mxu0 %v350
    %v517 = vpop.f32.mrf.mxu0
    %v518 = vadd.f32 0.0, %v517
    %v519 = vpop.f32.mrf.mxu0
    %v520 = vpop.f32.mrf.mxu0
    %v521 = vadd.f32 0.0, %v520
    %v522 = vpop.f32.mrf.mxu0
    %523 = vmatprep.mubr.bf16.mxu0 0
    %524 = vmatmul.mubr.bf16.gmra.mxu0 %v351
    %v525 = vpop.f32.mrf.mxu0
    %v526 = vadd.f32 0.0, %v525
    %v527 = vpop.f32.mrf.mxu0
    %v528 = vpop.f32.mrf.mxu0
    %v529 = vadd.f32 0.0, %v528
    %v530 = vpop.f32.mrf.mxu0
    %531 = vmatprep.mubr.bf16.mxu0 0
    %532 = vmatmul.mubr.bf16.gmra.mxu0 %v352
    %v533 = vpop.f32.mrf.mxu0
    %v534 = vadd.f32 0.0, %v533
    %v535 = vpop.f32.mrf.mxu0
    %v536 = vpop.f32.mrf.mxu0
    %v537 = vadd.f32 0.0, %v536
    %v538 = vpop.f32.mrf.mxu0
    %539 = vmatprep.mubr.bf16.mxu0 0
    %540 = vmatmul.mubr.bf16.gmra.mxu0 %v353
    %v541 = vpop.f32.mrf.mxu0
    %v542 = vadd.f32 0.0, %v541
    %v543 = vpop.f32.mrf.mxu0
    %v544 = vpop.f32.mrf.mxu0
    %v545 = vadd.f32 0.0, %v544
    %v546 = vpop.f32.mrf.mxu0
    %547 = vmatprep.mubr.bf16.mxu0 0
    %548 = vmatmul.mubr.bf16.gmra.mxu0 %v354
    %v549 = vpop.f32.mrf.mxu0
    %v550 = vadd.f32 0.0, %v549
    %v551 = vpop.f32.mrf.mxu0
    %v552 = vpop.f32.mrf.mxu0
    %v553 = vpop.f32.mrf.mxu0
    %554 = vdwg.mxu0
    %v555 = vadd.f32 %v292, %v454
    %v556 = vadd.f32 %v293, %v457
    %v557 = vadd.f32 %v294, %v462
    %v558 = vadd.f32 %v295, %v465
    %v559 = vadd.f32 %v296, %v470
    %v560 = vadd.f32 %v297, %v473
    %v561 = vadd.f32 %v298, %v478
    %v562 = vadd.f32 %v299, %v481
    %v563 = vadd.f32 %v300, %v486
    %v564 = vadd.f32 %v301, %v489
    %v565 = vadd.f32 %v302, %v494
    %v566 = vadd.f32 %v303, %v497
    %v567 = vadd.f32 %v304, %v502
    %v568 = vadd.f32 %v305, %v505
    %v569 = vadd.f32 %v306, %v510
    %v570 = vadd.f32 %v307, %v513
    %v571 = vadd.f32 %v308, %v518
    %v572 = vadd.f32 %v309, %v521
    %v573 = vadd.f32 %v310, %v526
    %v574 = vadd.f32 %v311, %v529
    %v575 = vadd.f32 %v312, %v534
    %v576 = vadd.f32 %v313, %v537
    %v577 = vadd.f32 %v314, %v542
    %v578 = vadd.f32 %v315, %v545
    %v579 = vadd.f32 %v316, %v550
    %v580 = vld [vmem:[#allocation2 + $0x2] sm:$0xff]
    %v581 = vld [vmem:[#allocation2 + $0xa] sm:$0xff]
    %v582 = vld [vmem:[#allocation2 + $0x12] sm:$0xff]
    %v583 = vld [vmem:[#allocation2 + $0x1a] sm:$0xff]
    %v584 = vld [vmem:[#allocation2 + $0x22] sm:$0xff]
    %v585 = vld [vmem:[#allocation2 + $0x2a] sm:$0xff]
    %v586 = vld [vmem:[#allocation2 + $0x32] sm:$0xff]
    %v587 = vld [vmem:[#allocation2 + $0x3a] sm:$0xff]
    %v588 = vld [vmem:[#allocation2 + $0x42] sm:$0xff]
    %v589 = vld [vmem:[#allocation2 + $0x4a] sm:$0xff]
    %v590 = vld [vmem:[#allocation2 + $0x52] sm:$0xff]
    %v591 = vld [vmem:[#allocation2 + $0x5a] sm:$0xff]
    %v592 = vld [vmem:[#allocation2 + $0x62] sm:$0xff]
    %v593 = vld [vmem:[#allocation2 + $0x6a] sm:$0xff]
    %v594 = vld [vmem:[#allocation2 + $0x72] sm:$0xff]
    %v595 = vld [vmem:[#allocation2 + $0x7a] sm:$0xff]
    %v596 = vld [vmem:[#allocation2 + $0x82] sm:$0xff]
    %v597 = vld [vmem:[#allocation2 + $0x8a] sm:$0xff]
    %v598 = vld [vmem:[#allocation2 + $0x92] sm:$0xff]
    %v599 = vld [vmem:[#allocation2 + $0x9a] sm:$0xff]
    %v600 = vld [vmem:[#allocation2 + $0xa2] sm:$0xff]
    %v601 = vld [vmem:[#allocation2 + $0xaa] sm:$0xff]
    %v602 = vld [vmem:[#allocation2 + $0xb2] sm:$0xff]
    %v603 = vld [vmem:[#allocation2 + $0xba] sm:$0xff]
    %v604 = vld [vmem:[#allocation2 + $0xc2] sm:$0xff]
    %v605 = vpack.c.bf16 %v581, %v580
    %v606 = vpack.c.bf16 %v583, %v582
    %v607 = vpack.c.bf16 %v585, %v584
    %v608 = vpack.c.bf16 %v587, %v586
    %v609 = vpack.c.bf16 %v589, %v588
    %v610 = vpack.c.bf16 %v591, %v590
    %v611 = vpack.c.bf16 %v593, %v592
    %v612 = vpack.c.bf16 %v595, %v594
    %v613 = vpack.c.bf16 %v597, %v596
    %v614 = vpack.c.bf16 %v599, %v598
    %v615 = vpack.c.bf16 %v601, %v600
    %v616 = vpack.c.bf16 %v603, %v602
    %v617 = vpack.c.bf16 %v604, %v604
    %v618 = vld [vmem:[#allocation5 + $0x80] sm:$0xf]
    %v619 = vld [vmem:[#allocation5 + $0x84] sm:$0xf]
    %v620 = vld [vmem:[#allocation5 + $0x88] sm:$0xf]
    %v621 = vld [vmem:[#allocation5 + $0x8c] sm:$0xf]
    %v622 = vld [vmem:[#allocation5 + $0x90] sm:$0xf]
    %v623 = vld [vmem:[#allocation5 + $0x94] sm:$0xf]
    %v624 = vld [vmem:[#allocation5 + $0x98] sm:$0xf]
    %v625 = vld [vmem:[#allocation5 + $0x9c] sm:$0xf]
    %v626 = vld [vmem:[#allocation5 + $0xa0] sm:$0xf]
    %v627 = vld [vmem:[#allocation5 + $0xa4] sm:$0xf]
    %v628 = vld [vmem:[#allocation5 + $0xa8] sm:$0xf]
    %v629 = vld [vmem:[#allocation5 + $0xac] sm:$0xf]
    %v630 = vld [vmem:[#allocation5 + $0xb0] sm:$0xf]
    %v631 = vld [vmem:[#allocation5 + $0xb4] sm:$0xf]
    %v632 = vld [vmem:[#allocation5 + $0xb8] sm:$0xf]
    %v633 = vld [vmem:[#allocation5 + $0xbc] sm:$0xf]
    %v650 = vunpack.c.l.b16 %v618
    %v651 = vunpack.c.l.b16 %v619
    %v652 = vunpack.c.l.b16 %v620
    %v653 = vunpack.c.l.b16 %v621
    %v654 = vunpack.c.l.b16 %v622
    %v655 = vunpack.c.l.b16 %v623
    %v656 = vunpack.c.l.b16 %v624
    %v657 = vunpack.c.l.b16 %v625
    %v658 = vunpack.c.l.b16 %v626
    %v659 = vunpack.c.l.b16 %v627
    %v660 = vunpack.c.l.b16 %v628
    %v661 = vunpack.c.l.b16 %v629
    %v662 = vunpack.c.l.b16 %v630
    %v663 = vunpack.c.l.b16 %v631
    %v664 = vunpack.c.l.b16 %v632
    %v665 = vunpack.c.l.b16 %v633
    %v666 = vpack.c.b16 %v651, %v650
    %v667 = vpack.c.b16 %v653, %v652
    %v668 = vpack.c.b16 %v655, %v654
    %v669 = vpack.c.b16 %v657, %v656
    %v670 = vpack.c.b16 %v659, %v658
    %v671 = vpack.c.b16 %v661, %v660
    %v672 = vpack.c.b16 %v663, %v662
    %v673 = vpack.c.b16 %v665, %v664
    %682 = vmatprep.subr.bf16.mxu0 0
    %683 = vmatpush1.bf16.msra.mxu0 %v673
    %684 = vmatprep.subr.bf16.mxu0 0
    %685 = vmatpush1.bf16.msra.mxu0 %v672
    %686 = vmatprep.subr.bf16.mxu0 0
    %687 = vmatpush1.bf16.msra.mxu0 %v671
    %688 = vmatprep.subr.bf16.mxu0 0
    %689 = vmatpush1.bf16.msra.mxu0 %v670
    %690 = vmatprep.subr.bf16.mxu0 0
    %691 = vmatpush1.bf16.msra.mxu0 %v669
    %692 = vmatprep.subr.bf16.mxu0 0
    %693 = vmatpush1.bf16.msra.mxu0 %v668
    %694 = vmatprep.subr.bf16.mxu0 0
    %695 = vmatpush1.bf16.msra.mxu0 %v667
    %696 = vmatprep.subr.bf16.mxu0 0
    %697 = vmatpush1.bf16.msra.mxu0 %v666
    %698 = vmatprep.subr.bf16.mxu0 0
    %699 = vmatpush2.bf16.msra.mxu0 0
    %700 = vmatprep.subr.bf16.mxu0 0
    %701 = vmatpush2.bf16.msra.mxu0 0
    %702 = vmatprep.subr.bf16.mxu0 0
    %703 = vmatpush2.bf16.msra.mxu0 0
    %704 = vmatprep.subr.bf16.mxu0 0
    %705 = vmatpush2.bf16.msra.mxu0 0
    %706 = vmatprep.subr.bf16.mxu0 0
    %707 = vmatpush2.bf16.msra.mxu0 0
    %708 = vmatprep.subr.bf16.mxu0 0
    %709 = vmatpush2.bf16.msra.mxu0 0
    %710 = vmatprep.subr.bf16.mxu0 0
    %711 = vmatpush2.bf16.msra.mxu0 0
    %712 = vmatprep.subr.bf16.mxu0 0
    %713 = vmatpush2.bf16.msra.mxu0 0
    %714 = vmatprep.mubr.bf16.mxu0 0
    %715 = vmatmul.mubr.bf16.gmra.mxu0 %v605
    %v716 = vpop.f32.mrf.mxu0
    %v717 = vadd.f32 0.0, %v716
    %v718 = vpop.f32.mrf.mxu0
    %v719 = vpop.f32.mrf.mxu0
    %v720 = vadd.f32 0.0, %v719
    %v721 = vpop.f32.mrf.mxu0
    %722 = vmatprep.mubr.bf16.mxu0 0
    %723 = vmatmul.mubr.bf16.gmra.mxu0 %v606
    %v724 = vpop.f32.mrf.mxu0
    %v725 = vadd.f32 0.0, %v724
    %v726 = vpop.f32.mrf.mxu0
    %v727 = vpop.f32.mrf.mxu0
    %v728 = vadd.f32 0.0, %v727
    %v729 = vpop.f32.mrf.mxu0
    %730 = vmatprep.mubr.bf16.mxu0 0
    %731 = vmatmul.mubr.bf16.gmra.mxu0 %v607
    %v732 = vpop.f32.mrf.mxu0
    %v733 = vadd.f32 0.0, %v732
    %v734 = vpop.f32.mrf.mxu0
    %v735 = vpop.f32.mrf.mxu0
    %v736 = vadd.f32 0.0, %v735
    %v737 = vpop.f32.mrf.mxu0
    %738 = vmatprep.mubr.bf16.mxu0 0
    %739 = vmatmul.mubr.bf16.gmra.mxu0 %v608
    %v740 = vpop.f32.mrf.mxu0
    %v741 = vadd.f32 0.0, %v740
    %v742 = vpop.f32.mrf.mxu0
    %v743 = vpop.f32.mrf.mxu0
    %v744 = vadd.f32 0.0, %v743
    %v745 = vpop.f32.mrf.mxu0
    %746 = vmatprep.mubr.bf16.mxu0 0
    %747 = vmatmul.mubr.bf16.gmra.mxu0 %v609
    %v748 = vpop.f32.mrf.mxu0
    %v749 = vadd.f32 0.0, %v748
    %v750 = vpop.f32.mrf.mxu0
    %v751 = vpop.f32.mrf.mxu0
    %v752 = vadd.f32 0.0, %v751
    %v753 = vpop.f32.mrf.mxu0
    %754 = vmatprep.mubr.bf16.mxu0 0
    %755 = vmatmul.mubr.bf16.gmra.mxu0 %v610
    %v756 = vpop.f32.mrf.mxu0
    %v757 = vadd.f32 0.0, %v756
    %v758 = vpop.f32.mrf.mxu0
    %v759 = vpop.f32.mrf.mxu0
    %v760 = vadd.f32 0.0, %v759
    %v761 = vpop.f32.mrf.mxu0
    %762 = vmatprep.mubr.bf16.mxu0 0
    %763 = vmatmul.mubr.bf16.gmra.mxu0 %v611
    %v764 = vpop.f32.mrf.mxu0
    %v765 = vadd.f32 0.0, %v764
    %v766 = vpop.f32.mrf.mxu0
    %v767 = vpop.f32.mrf.mxu0
    %v768 = vadd.f32 0.0, %v767
    %v769 = vpop.f32.mrf.mxu0
    %770 = vmatprep.mubr.bf16.mxu0 0
    %771 = vmatmul.mubr.bf16.gmra.mxu0 %v612
    %v772 = vpop.f32.mrf.mxu0
    %v773 = vadd.f32 0.0, %v772
    %v774 = vpop.f32.mrf.mxu0
    %v775 = vpop.f32.mrf.mxu0
    %v776 = vadd.f32 0.0, %v775
    %v777 = vpop.f32.mrf.mxu0
    %778 = vmatprep.mubr.bf16.mxu0 0
    %779 = vmatmul.mubr.bf16.gmra.mxu0 %v613
    %v780 = vpop.f32.mrf.mxu0
    %v781 = vadd.f32 0.0, %v780
    %v782 = vpop.f32.mrf.mxu0
    %v783 = vpop.f32.mrf.mxu0
    %v784 = vadd.f32 0.0, %v783
    %v785 = vpop.f32.mrf.mxu0
    %786 = vmatprep.mubr.bf16.mxu0 0
    %787 = vmatmul.mubr.bf16.gmra.mxu0 %v614
    %v788 = vpop.f32.mrf.mxu0
    %v789 = vadd.f32 0.0, %v788
    %v790 = vpop.f32.mrf.mxu0
    %v791 = vpop.f32.mrf.mxu0
    %v792 = vadd.f32 0.0, %v791
    %v793 = vpop.f32.mrf.mxu0
    %794 = vmatprep.mubr.bf16.mxu0 0
    %795 = vmatmul.mubr.bf16.gmra.mxu0 %v615
    %v796 = vpop.f32.mrf.mxu0
    %v797 = vadd.f32 0.0, %v796
    %v798 = vpop.f32.mrf.mxu0
    %v799 = vpop.f32.mrf.mxu0
    %v800 = vadd.f32 0.0, %v799
    %v801 = vpop.f32.mrf.mxu0
    %802 = vmatprep.mubr.bf16.mxu0 0
    %803 = vmatmul.mubr.bf16.gmra.mxu0 %v616
    %v804 = vpop.f32.mrf.mxu0
    %v805 = vadd.f32 0.0, %v804
    %v806 = vpop.f32.mrf.mxu0
    %v807 = vpop.f32.mrf.mxu0
    %v808 = vadd.f32 0.0, %v807
    %v809 = vpop.f32.mrf.mxu0
    %810 = vmatprep.mubr.bf16.mxu0 0
    %811 = vmatmul.mubr.bf16.gmra.mxu0 %v617
    %v812 = vpop.f32.mrf.mxu0
    %v813 = vadd.f32 0.0, %v812
    %v814 = vpop.f32.mrf.mxu0
    %v815 = vpop.f32.mrf.mxu0
    %v816 = vpop.f32.mrf.mxu0
    %817 = vdwg.mxu0
    %v818 = vadd.f32 %v555, %v717
    %v819 = vadd.f32 %v556, %v720
    %v820 = vadd.f32 %v557, %v725
    %v821 = vadd.f32 %v558, %v728
    %v822 = vadd.f32 %v559, %v733
    %v823 = vadd.f32 %v560, %v736
    %v824 = vadd.f32 %v561, %v741
    %v825 = vadd.f32 %v562, %v744
    %v826 = vadd.f32 %v563, %v749
    %v827 = vadd.f32 %v564, %v752
    %v828 = vadd.f32 %v565, %v757
    %v829 = vadd.f32 %v566, %v760
    %v830 = vadd.f32 %v567, %v765
    %v831 = vadd.f32 %v568, %v768
    %v832 = vadd.f32 %v569, %v773
    %v833 = vadd.f32 %v570, %v776
    %v834 = vadd.f32 %v571, %v781
    %v835 = vadd.f32 %v572, %v784
    %v836 = vadd.f32 %v573, %v789
    %v837 = vadd.f32 %v574, %v792
    %v838 = vadd.f32 %v575, %v797
    %v839 = vadd.f32 %v576, %v800
    %v840 = vadd.f32 %v577, %v805
    %v841 = vadd.f32 %v578, %v808
    %v842 = vadd.f32 %v579, %v813
    %v843 = vld [vmem:[#allocation2 + $0xa] sm:$0xff]
    %v844 = vld [vmem:[#allocation2 + $0x12] sm:$0xff]
    %v845 = vld [vmem:[#allocation2 + $0x1a] sm:$0xff]
    %v846 = vld [vmem:[#allocation2 + $0x22] sm:$0xff]
    %v847 = vld [vmem:[#allocation2 + $0x2a] sm:$0xff]
    %v848 = vld [vmem:[#allocation2 + $0x32] sm:$0xff]
    %v849 = vld [vmem:[#allocation2 + $0x3a] sm:$0xff]
    %v850 = vld [vmem:[#allocation2 + $0x42] sm:$0xff]
    %v851 = vld [vmem:[#allocation2 + $0x4a] sm:$0xff]
    %v852 = vld [vmem:[#allocation2 + $0x52] sm:$0xff]
    %v853 = vld [vmem:[#allocation2 + $0x5a] sm:$0xff]
    %v854 = vld [vmem:[#allocation2 + $0x62] sm:$0xff]
    %v855 = vld [vmem:[#allocation2 + $0x6a] sm:$0xff]
    %v856 = vld [vmem:[#allocation2 + $0x72] sm:$0xff]
    %v857 = vld [vmem:[#allocation2 + $0x7a] sm:$0xff]
    %v858 = vld [vmem:[#allocation2 + $0x82] sm:$0xff]
    %v859 = vld [vmem:[#allocation2 + $0x8a] sm:$0xff]
    %v860 = vld [vmem:[#allocation2 + $0x92] sm:$0xff]
    %v861 = vld [vmem:[#allocation2 + $0x9a] sm:$0xff]
    %v862 = vld [vmem:[#allocation2 + $0xa2] sm:$0xff]
    %v863 = vld [vmem:[#allocation2 + $0xaa] sm:$0xff]
    %v864 = vld [vmem:[#allocation2 + $0xb2] sm:$0xff]
    %v865 = vld [vmem:[#allocation2 + $0xba] sm:$0xff]
    %v866 = vld [vmem:[#allocation2 + $0xc2] sm:$0xff]
    %v867 = vld [vmem:[#allocation2 + $0xca] sm:$0xff]
    %v868 = vpack.c.bf16 %v844, %v843
    %v869 = vpack.c.bf16 %v846, %v845
    %v870 = vpack.c.bf16 %v848, %v847
    %v871 = vpack.c.bf16 %v850, %v849
    %v872 = vpack.c.bf16 %v852, %v851
    %v873 = vpack.c.bf16 %v854, %v853
    %v874 = vpack.c.bf16 %v856, %v855
    %v875 = vpack.c.bf16 %v858, %v857
    %v876 = vpack.c.bf16 %v860, %v859
    %v877 = vpack.c.bf16 %v862, %v861
    %v878 = vpack.c.bf16 %v864, %v863
    %v879 = vpack.c.bf16 %v866, %v865
    %v880 = vpack.c.bf16 %v867, %v867
    %v881 = vld [vmem:[#allocation5 + $0xc0] sm:$0xf]
    %v882 = vld [vmem:[#allocation5 + $0xc4] sm:$0xf]
    %v883 = vld [vmem:[#allocation5 + $0xc8] sm:$0xf]
    %v884 = vld [vmem:[#allocation5 + $0xcc] sm:$0xf]
    %v885 = vld [vmem:[#allocation5 + $0xd0] sm:$0xf]
    %v886 = vld [vmem:[#allocation5 + $0xd4] sm:$0xf]
    %v887 = vld [vmem:[#allocation5 + $0xd8] sm:$0xf]
    %v888 = vld [vmem:[#allocation5 + $0xdc] sm:$0xf]
    %v889 = vld [vmem:[#allocation5 + $0xe0] sm:$0xf]
    %v890 = vld [vmem:[#allocation5 + $0xe4] sm:$0xf]
    %v891 = vld [vmem:[#allocation5 + $0xe8] sm:$0xf]
    %v892 = vld [vmem:[#allocation5 + $0xec] sm:$0xf]
    %v893 = vld [vmem:[#allocation5 + $0xf0] sm:$0xf]
    %v894 = vld [vmem:[#allocation5 + $0xf4] sm:$0xf]
    %v895 = vld [vmem:[#allocation5 + $0xf8] sm:$0xf]
    %v896 = vld [vmem:[#allocation5 + $0xfc] sm:$0xf]
    %v913 = vunpack.c.l.b16 %v881
    %v914 = vunpack.c.l.b16 %v882
    %v915 = vunpack.c.l.b16 %v883
    %v916 = vunpack.c.l.b16 %v884
    %v917 = vunpack.c.l.b16 %v885
    %v918 = vunpack.c.l.b16 %v886
    %v919 = vunpack.c.l.b16 %v887
    %v920 = vunpack.c.l.b16 %v888
    %v921 = vunpack.c.l.b16 %v889
    %v922 = vunpack.c.l.b16 %v890
    %v923 = vunpack.c.l.b16 %v891
    %v924 = vunpack.c.l.b16 %v892
    %v925 = vunpack.c.l.b16 %v893
    %v926 = vunpack.c.l.b16 %v894
    %v927 = vunpack.c.l.b16 %v895
    %v928 = vunpack.c.l.b16 %v896
    %v929 = vpack.c.b16 %v914, %v913
    %v930 = vpack.c.b16 %v916, %v915
    %v931 = vpack.c.b16 %v918, %v917
    %v932 = vpack.c.b16 %v920, %v919
    %v933 = vpack.c.b16 %v922, %v921
    %v934 = vpack.c.b16 %v924, %v923
    %v935 = vpack.c.b16 %v926, %v925
    %v936 = vpack.c.b16 %v928, %v927
    %945 = vmatprep.subr.bf16.mxu0 0
    %946 = vmatpush1.bf16.msra.mxu0 %v936
    %947 = vmatprep.subr.bf16.mxu0 0
    %948 = vmatpush1.bf16.msra.mxu0 %v935
    %949 = vmatprep.subr.bf16.mxu0 0
    %950 = vmatpush1.bf16.msra.mxu0 %v934
    %951 = vmatprep.subr.bf16.mxu0 0
    %952 = vmatpush1.bf16.msra.mxu0 %v933
    %953 = vmatprep.subr.bf16.mxu0 0
    %954 = vmatpush1.bf16.msra.mxu0 %v932
    %955 = vmatprep.subr.bf16.mxu0 0
    %956 = vmatpush1.bf16.msra.mxu0 %v931
    %957 = vmatprep.subr.bf16.mxu0 0
    %958 = vmatpush1.bf16.msra.mxu0 %v930
    %959 = vmatprep.subr.bf16.mxu0 0
    %960 = vmatpush1.bf16.msra.mxu0 %v929
    %961 = vmatprep.subr.bf16.mxu0 0
    %962 = vmatpush2.bf16.msra.mxu0 0
    %963 = vmatprep.subr.bf16.mxu0 0
    %964 = vmatpush2.bf16.msra.mxu0 0
    %965 = vmatprep.subr.bf16.mxu0 0
    %966 = vmatpush2.bf16.msra.mxu0 0
    %967 = vmatprep.subr.bf16.mxu0 0
    %968 = vmatpush2.bf16.msra.mxu0 0
    %969 = vmatprep.subr.bf16.mxu0 0
    %970 = vmatpush2.bf16.msra.mxu0 0
    %971 = vmatprep.subr.bf16.mxu0 0
    %972 = vmatpush2.bf16.msra.mxu0 0
    %973 = vmatprep.subr.bf16.mxu0 0
    %974 = vmatpush2.bf16.msra.mxu0 0
    %975 = vmatprep.subr.bf16.mxu0 0
    %976 = vmatpush2.bf16.msra.mxu0 0
    %977 = vmatprep.mubr.bf16.mxu0 0
    %978 = vmatmul.mubr.bf16.gmra.mxu0 %v868
    %v979 = vpop.f32.mrf.mxu0
    %v980 = vadd.f32 0.0, %v979
    %v981 = vpop.f32.mrf.mxu0
    %v982 = vpop.f32.mrf.mxu0
    %v983 = vadd.f32 0.0, %v982
    %v984 = vpop.f32.mrf.mxu0
    %985 = vmatprep.mubr.bf16.mxu0 0
    %986 = vmatmul.mubr.bf16.gmra.mxu0 %v869
    %v987 = vpop.f32.mrf.mxu0
    %v988 = vadd.f32 0.0, %v987
    %v989 = vpop.f32.mrf.mxu0
    %v990 = vpop.f32.mrf.mxu0
    %v991 = vadd.f32 0.0, %v990
    %v992 = vpop.f32.mrf.mxu0
    %993 = vmatprep.mubr.bf16.mxu0 0
    %994 = vmatmul.mubr.bf16.gmra.mxu0 %v870
    %v995 = vpop.f32.mrf.mxu0
    %v996 = vadd.f32 0.0, %v995
    %v997 = vpop.f32.mrf.mxu0
    %v998 = vpop.f32.mrf.mxu0
    %v999 = vadd.f32 0.0, %v998
    %v1000 = vpop.f32.mrf.mxu0
    %1001 = vmatprep.mubr.bf16.mxu0 0
    %1002 = vmatmul.mubr.bf16.gmra.mxu0 %v871
    %v1003 = vpop.f32.mrf.mxu0
    %v1004 = vadd.f32 0.0, %v1003
    %v1005 = vpop.f32.mrf.mxu0
    %v1006 = vpop.f32.mrf.mxu0
    %v1007 = vadd.f32 0.0, %v1006
    %v1008 = vpop.f32.mrf.mxu0
    %1009 = vmatprep.mubr.bf16.mxu0 0
    %1010 = vmatmul.mubr.bf16.gmra.mxu0 %v872
    %v1011 = vpop.f32.mrf.mxu0
    %v1012 = vadd.f32 0.0, %v1011
    %v1013 = vpop.f32.mrf.mxu0
    %v1014 = vpop.f32.mrf.mxu0
    %v1015 = vadd.f32 0.0, %v1014
    %v1016 = vpop.f32.mrf.mxu0
    %1017 = vmatprep.mubr.bf16.mxu0 0
    %1018 = vmatmul.mubr.bf16.gmra.mxu0 %v873
    %v1019 = vpop.f32.mrf.mxu0
    %v1020 = vadd.f32 0.0, %v1019
    %v1021 = vpop.f32.mrf.mxu0
    %v1022 = vpop.f32.mrf.mxu0
    %v1023 = vadd.f32 0.0, %v1022
    %v1024 = vpop.f32.mrf.mxu0
    %1025 = vmatprep.mubr.bf16.mxu0 0
    %1026 = vmatmul.mubr.bf16.gmra.mxu0 %v874
    %v1027 = vpop.f32.mrf.mxu0
    %v1028 = vadd.f32 0.0, %v1027
    %v1029 = vpop.f32.mrf.mxu0
    %v1030 = vpop.f32.mrf.mxu0
    %v1031 = vadd.f32 0.0, %v1030
    %v1032 = vpop.f32.mrf.mxu0
    %1033 = vmatprep.mubr.bf16.mxu0 0
    %1034 = vmatmul.mubr.bf16.gmra.mxu0 %v875
    %v1035 = vpop.f32.mrf.mxu0
    %v1036 = vadd.f32 0.0, %v1035
    %v1037 = vpop.f32.mrf.mxu0
    %v1038 = vpop.f32.mrf.mxu0
    %v1039 = vadd.f32 0.0, %v1038
    %v1040 = vpop.f32.mrf.mxu0
    %1041 = vmatprep.mubr.bf16.mxu0 0
    %1042 = vmatmul.mubr.bf16.gmra.mxu0 %v876
    %v1043 = vpop.f32.mrf.mxu0
    %v1044 = vadd.f32 0.0, %v1043
    %v1045 = vpop.f32.mrf.mxu0
    %v1046 = vpop.f32.mrf.mxu0
    %v1047 = vadd.f32 0.0, %v1046
    %v1048 = vpop.f32.mrf.mxu0
    %1049 = vmatprep.mubr.bf16.mxu0 0
    %1050 = vmatmul.mubr.bf16.gmra.mxu0 %v877
    %v1051 = vpop.f32.mrf.mxu0
    %v1052 = vadd.f32 0.0, %v1051
    %v1053 = vpop.f32.mrf.mxu0
    %v1054 = vpop.f32.mrf.mxu0
    %v1055 = vadd.f32 0.0, %v1054
    %v1056 = vpop.f32.mrf.mxu0
    %1057 = vmatprep.mubr.bf16.mxu0 0
    %1058 = vmatmul.mubr.bf16.gmra.mxu0 %v878
    %v1059 = vpop.f32.mrf.mxu0
    %v1060 = vadd.f32 0.0, %v1059
    %v1061 = vpop.f32.mrf.mxu0
    %v1062 = vpop.f32.mrf.mxu0
    %v1063 = vadd.f32 0.0, %v1062
    %v1064 = vpop.f32.mrf.mxu0
    %1065 = vmatprep.mubr.bf16.mxu0 0
    %1066 = vmatmul.mubr.bf16.gmra.mxu0 %v879
    %v1067 = vpop.f32.mrf.mxu0
    %v1068 = vadd.f32 0.0, %v1067
    %v1069 = vpop.f32.mrf.mxu0
    %v1070 = vpop.f32.mrf.mxu0
    %v1071 = vadd.f32 0.0, %v1070
    %v1072 = vpop.f32.mrf.mxu0
    %1073 = vmatprep.mubr.bf16.mxu0 0
    %1074 = vmatmul.mubr.bf16.gmra.mxu0 %v880
    %v1075 = vpop.f32.mrf.mxu0
    %v1076 = vadd.f32 0.0, %v1075
    %v1077 = vpop.f32.mrf.mxu0
    %v1078 = vpop.f32.mrf.mxu0
    %v1079 = vpop.f32.mrf.mxu0
    %1080 = vdwg.mxu0
    %v1081 = vadd.f32 %v818, %v980
    %v1082 = vadd.f32 %v819, %v983
    %v1083 = vadd.f32 %v820, %v988
    %v1084 = vadd.f32 %v821, %v991
    %v1085 = vadd.f32 %v822, %v996
    %v1086 = vadd.f32 %v823, %v999
    %v1087 = vadd.f32 %v824, %v1004
    %v1088 = vadd.f32 %v825, %v1007
    %v1089 = vadd.f32 %v826, %v1012
    %v1090 = vadd.f32 %v827, %v1015
    %v1091 = vadd.f32 %v828, %v1020
    %v1092 = vadd.f32 %v829, %v1023
    %v1093 = vadd.f32 %v830, %v1028
    %v1094 = vadd.f32 %v831, %v1031
    %v1095 = vadd.f32 %v832, %v1036
    %v1096 = vadd.f32 %v833, %v1039
    %v1097 = vadd.f32 %v834, %v1044
    %v1098 = vadd.f32 %v835, %v1047
    %v1099 = vadd.f32 %v836, %v1052
    %v1100 = vadd.f32 %v837, %v1055
    %v1101 = vadd.f32 %v838, %v1060
    %v1102 = vadd.f32 %v839, %v1063
    %v1103 = vadd.f32 %v840, %v1068
    %v1104 = vadd.f32 %v841, %v1071
    %v1105 = vadd.f32 %v842, %v1076
    %v1106 = vld [vmem:[#allocation2 + $0xb] sm:$0xff]
    %v1107 = vld [vmem:[#allocation2 + $0x13] sm:$0xff]
    %v1108 = vld [vmem:[#allocation2 + $0x1b] sm:$0xff]
    %v1109 = vld [vmem:[#allocation2 + $0x23] sm:$0xff]
    %v1110 = vld [vmem:[#allocation2 + $0x2b] sm:$0xff]
    %v1111 = vld [vmem:[#allocation2 + $0x33] sm:$0xff]
    %v1112 = vld [vmem:[#allocation2 + $0x3b] sm:$0xff]
    %v1113 = vld [vmem:[#allocation2 + $0x43] sm:$0xff]
    %v1114 = vld [vmem:[#allocation2 + $0x4b] sm:$0xff]
    %v1115 = vld [vmem:[#allocation2 + $0x53] sm:$0xff]
    %v1116 = vld [vmem:[#allocation2 + $0x5b] sm:$0xff]
    %v1117 = vld [vmem:[#allocation2 + $0x63] sm:$0xff]
    %v1118 = vld [vmem:[#allocation2 + $0x6b] sm:$0xff]
    %v1119 = vld [vmem:[#allocation2 + $0x73] sm:$0xff]
    %v1120 = vld [vmem:[#allocation2 + $0x7b] sm:$0xff]
    %v1121 = vld [vmem:[#allocation2 + $0x83] sm:$0xff]
    %v1122 = vld [vmem:[#allocation2 + $0x8b] sm:$0xff]
    %v1123 = vld [vmem:[#allocation2 + $0x93] sm:$0xff]
    %v1124 = vld [vmem:[#allocation2 + $0x9b] sm:$0xff]
    %v1125 = vld [vmem:[#allocation2 + $0xa3] sm:$0xff]
    %v1126 = vld [vmem:[#allocation2 + $0xab] sm:$0xff]
    %v1127 = vld [vmem:[#allocation2 + $0xb3] sm:$0xff]
    %v1128 = vld [vmem:[#allocation2 + $0xbb] sm:$0xff]
    %v1129 = vld [vmem:[#allocation2 + $0xc3] sm:$0xff]
    %v1130 = vld [vmem:[#allocation2 + $0xcb] sm:$0xff]
    %v1131 = vpack.c.bf16 %v1107, %v1106
    %v1132 = vpack.c.bf16 %v1109, %v1108
    %v1133 = vpack.c.bf16 %v1111, %v1110
    %v1134 = vpack.c.bf16 %v1113, %v1112
    %v1135 = vpack.c.bf16 %v1115, %v1114
    %v1136 = vpack.c.bf16 %v1117, %v1116
    %v1137 = vpack.c.bf16 %v1119, %v1118
    %v1138 = vpack.c.bf16 %v1121, %v1120
    %v1139 = vpack.c.bf16 %v1123, %v1122
    %v1140 = vpack.c.bf16 %v1125, %v1124
    %v1141 = vpack.c.bf16 %v1127, %v1126
    %v1142 = vpack.c.bf16 %v1129, %v1128
    %v1143 = vpack.c.bf16 %v1130, %v1130
    %v1144 = vld [vmem:[#allocation5 + $0x100] sm:$0xf]
    %v1145 = vld [vmem:[#allocation5 + $0x104] sm:$0xf]
    %v1146 = vld [vmem:[#allocation5 + $0x108] sm:$0xf]
    %v1147 = vld [vmem:[#allocation5 + $0x10c] sm:$0xf]
    %v1148 = vld [vmem:[#allocation5 + $0x110] sm:$0xf]
    %v1149 = vld [vmem:[#allocation5 + $0x114] sm:$0xf]
    %v1150 = vld [vmem:[#allocation5 + $0x118] sm:$0xf]
    %v1151 = vld [vmem:[#allocation5 + $0x11c] sm:$0xf]
    %v1152 = vld [vmem:[#allocation5 + $0x120] sm:$0xf]
    %v1153 = vld [vmem:[#allocation5 + $0x124] sm:$0xf]
    %v1154 = vld [vmem:[#allocation5 + $0x128] sm:$0xf]
    %v1155 = vld [vmem:[#allocation5 + $0x12c] sm:$0xf]
    %v1156 = vld [vmem:[#allocation5 + $0x130] sm:$0xf]
    %v1157 = vld [vmem:[#allocation5 + $0x134] sm:$0xf]
    %v1158 = vld [vmem:[#allocation5 + $0x138] sm:$0xf]
    %v1159 = vld [vmem:[#allocation5 + $0x13c] sm:$0xf]
    %v1176 = vunpack.c.l.b16 %v1144
    %v1177 = vunpack.c.l.b16 %v1145
    %v1178 = vunpack.c.l.b16 %v1146
    %v1179 = vunpack.c.l.b16 %v1147
    %v1180 = vunpack.c.l.b16 %v1148
    %v1181 = vunpack.c.l.b16 %v1149
    %v1182 = vunpack.c.l.b16 %v1150
    %v1183 = vunpack.c.l.b16 %v1151
    %v1184 = vunpack.c.l.b16 %v1152
    %v1185 = vunpack.c.l.b16 %v1153
    %v1186 = vunpack.c.l.b16 %v1154
    %v1187 = vunpack.c.l.b16 %v1155
    %v1188 = vunpack.c.l.b16 %v1156
    %v1189 = vunpack.c.l.b16 %v1157
    %v1190 = vunpack.c.l.b16 %v1158
    %v1191 = vunpack.c.l.b16 %v1159
    %v1192 = vpack.c.b16 %v1177, %v1176
    %v1193 = vpack.c.b16 %v1179, %v1178
    %v1194 = vpack.c.b16 %v1181, %v1180
    %v1195 = vpack.c.b16 %v1183, %v1182
    %v1196 = vpack.c.b16 %v1185, %v1184
    %v1197 = vpack.c.b16 %v1187, %v1186
    %v1198 = vpack.c.b16 %v1189, %v1188
    %v1199 = vpack.c.b16 %v1191, %v1190
    %1208 = vmatprep.subr.bf16.mxu0 0
    %1209 = vmatpush1.bf16.msra.mxu0 %v1199
    %1210 = vmatprep.subr.bf16.mxu0 0
    %1211 = vmatpush1.bf16.msra.mxu0 %v1198
    %1212 = vmatprep.subr.bf16.mxu0 0
    %1213 = vmatpush1.bf16.msra.mxu0 %v1197
    %1214 = vmatprep.subr.bf16.mxu0 0
    %1215 = vmatpush1.bf16.msra.mxu0 %v1196
    %1216 = vmatprep.subr.bf16.mxu0 0
    %1217 = vmatpush1.bf16.msra.mxu0 %v1195
    %1218 = vmatprep.subr.bf16.mxu0 0
    %1219 = vmatpush1.bf16.msra.mxu0 %v1194
    %1220 = vmatprep.subr.bf16.mxu0 0
    %1221 = vmatpush1.bf16.msra.mxu0 %v1193
    %1222 = vmatprep.subr.bf16.mxu0 0
    %1223 = vmatpush1.bf16.msra.mxu0 %v1192
    %1224 = vmatprep.subr.bf16.mxu0 0
    %1225 = vmatpush2.bf16.msra.mxu0 0
    %1226 = vmatprep.subr.bf16.mxu0 0
    %1227 = vmatpush2.bf16.msra.mxu0 0
    %1228 = vmatprep.subr.bf16.mxu0 0
    %1229 = vmatpush2.bf16.msra.mxu0 0
    %1230 = vmatprep.subr.bf16.mxu0 0
    %1231 = vmatpush2.bf16.msra.mxu0 0
    %1232 = vmatprep.subr.bf16.mxu0 0
    %1233 = vmatpush2.bf16.msra.mxu0 0
    %1234 = vmatprep.subr.bf16.mxu0 0
    %1235 = vmatpush2.bf16.msra.mxu0 0
    %1236 = vmatprep.subr.bf16.mxu0 0
    %1237 = vmatpush2.bf16.msra.mxu0 0
    %1238 = vmatprep.subr.bf16.mxu0 0
    %1239 = vmatpush2.bf16.msra.mxu0 0
    %1240 = vmatprep.mubr.bf16.mxu0 0
    %1241 = vmatmul.mubr.bf16.gmra.mxu0 %v1131
    %v1242 = vpop.f32.mrf.mxu0
    %v1243 = vadd.f32 0.0, %v1242
    %v1244 = vpop.f32.mrf.mxu0
    %v1245 = vpop.f32.mrf.mxu0
    %v1246 = vadd.f32 0.0, %v1245
    %v1247 = vpop.f32.mrf.mxu0
    %1248 = vmatprep.mubr.bf16.mxu0 0
    %1249 = vmatmul.mubr.bf16.gmra.mxu0 %v1132
    %v1250 = vpop.f32.mrf.mxu0
    %v1251 = vadd.f32 0.0, %v1250
    %v1252 = vpop.f32.mrf.mxu0
    %v1253 = vpop.f32.mrf.mxu0
    %v1254 = vadd.f32 0.0, %v1253
    %v1255 = vpop.f32.mrf.mxu0
    %1256 = vmatprep.mubr.bf16.mxu0 0
    %1257 = vmatmul.mubr.bf16.gmra.mxu0 %v1133
    %v1258 = vpop.f32.mrf.mxu0
    %v1259 = vadd.f32 0.0, %v1258
    %v1260 = vpop.f32.mrf.mxu0
    %v1261 = vpop.f32.mrf.mxu0
    %v1262 = vadd.f32 0.0, %v1261
    %v1263 = vpop.f32.mrf.mxu0
    %1264 = vmatprep.mubr.bf16.mxu0 0
    %1265 = vmatmul.mubr.bf16.gmra.mxu0 %v1134
    %v1266 = vpop.f32.mrf.mxu0
    %v1267 = vadd.f32 0.0, %v1266
    %v1268 = vpop.f32.mrf.mxu0
    %v1269 = vpop.f32.mrf.mxu0
    %v1270 = vadd.f32 0.0, %v1269
    %v1271 = vpop.f32.mrf.mxu0
    %1272 = vmatprep.mubr.bf16.mxu0 0
    %1273 = vmatmul.mubr.bf16.gmra.mxu0 %v1135
    %v1274 = vpop.f32.mrf.mxu0
    %v1275 = vadd.f32 0.0, %v1274
    %v1276 = vpop.f32.mrf.mxu0
    %v1277 = vpop.f32.mrf.mxu0
    %v1278 = vadd.f32 0.0, %v1277
    %v1279 = vpop.f32.mrf.mxu0
    %1280 = vmatprep.mubr.bf16.mxu0 0
    %1281 = vmatmul.mubr.bf16.gmra.mxu0 %v1136
    %v1282 = vpop.f32.mrf.mxu0
    %v1283 = vadd.f32 0.0, %v1282
    %v1284 = vpop.f32.mrf.mxu0
    %v1285 = vpop.f32.mrf.mxu0
    %v1286 = vadd.f32 0.0, %v1285
    %v1287 = vpop.f32.mrf.mxu0
    %1288 = vmatprep.mubr.bf16.mxu0 0
    %1289 = vmatmul.mubr.bf16.gmra.mxu0 %v1137
    %v1290 = vpop.f32.mrf.mxu0
    %v1291 = vadd.f32 0.0, %v1290
    %v1292 = vpop.f32.mrf.mxu0
    %v1293 = vpop.f32.mrf.mxu0
    %v1294 = vadd.f32 0.0, %v1293
    %v1295 = vpop.f32.mrf.mxu0
    %1296 = vmatprep.mubr.bf16.mxu0 0
    %1297 = vmatmul.mubr.bf16.gmra.mxu0 %v1138
    %v1298 = vpop.f32.mrf.mxu0
    %v1299 = vadd.f32 0.0, %v1298
    %v1300 = vpop.f32.mrf.mxu0
    %v1301 = vpop.f32.mrf.mxu0
    %v1302 = vadd.f32 0.0, %v1301
    %v1303 = vpop.f32.mrf.mxu0
    %1304 = vmatprep.mubr.bf16.mxu0 0
    %1305 = vmatmul.mubr.bf16.gmra.mxu0 %v1139
    %v1306 = vpop.f32.mrf.mxu0
    %v1307 = vadd.f32 0.0, %v1306
    %v1308 = vpop.f32.mrf.mxu0
    %v1309 = vpop.f32.mrf.mxu0
    %v1310 = vadd.f32 0.0, %v1309
    %v1311 = vpop.f32.mrf.mxu0
    %1312 = vmatprep.mubr.bf16.mxu0 0
    %1313 = vmatmul.mubr.bf16.gmra.mxu0 %v1140
    %v1314 = vpop.f32.mrf.mxu0
    %v1315 = vadd.f32 0.0, %v1314
    %v1316 = vpop.f32.mrf.mxu0
    %v1317 = vpop.f32.mrf.mxu0
    %v1318 = vadd.f32 0.0, %v1317
    %v1319 = vpop.f32.mrf.mxu0
    %1320 = vmatprep.mubr.bf16.mxu0 0
    %1321 = vmatmul.mubr.bf16.gmra.mxu0 %v1141
    %v1322 = vpop.f32.mrf.mxu0
    %v1323 = vadd.f32 0.0, %v1322
    %v1324 = vpop.f32.mrf.mxu0
    %v1325 = vpop.f32.mrf.mxu0
    %v1326 = vadd.f32 0.0, %v1325
    %v1327 = vpop.f32.mrf.mxu0
    %1328 = vmatprep.mubr.bf16.mxu0 0
    %1329 = vmatmul.mubr.bf16.gmra.mxu0 %v1142
    %v1330 = vpop.f32.mrf.mxu0
    %v1331 = vadd.f32 0.0, %v1330
    %v1332 = vpop.f32.mrf.mxu0
    %v1333 = vpop.f32.mrf.mxu0
    %v1334 = vadd.f32 0.0, %v1333
    %v1335 = vpop.f32.mrf.mxu0
    %1336 = vmatprep.mubr.bf16.mxu0 0
    %1337 = vmatmul.mubr.bf16.gmra.mxu0 %v1143
    %v1338 = vpop.f32.mrf.mxu0
    %v1339 = vadd.f32 0.0, %v1338
    %v1340 = vpop.f32.mrf.mxu0
    %v1341 = vpop.f32.mrf.mxu0
    %v1342 = vpop.f32.mrf.mxu0
    %1343 = vdwg.mxu0
    %v1344 = vadd.f32 %v1081, %v1243
    %v1345 = vadd.f32 %v1082, %v1246
    %v1346 = vadd.f32 %v1083, %v1251
    %v1347 = vadd.f32 %v1084, %v1254
    %v1348 = vadd.f32 %v1085, %v1259
    %v1349 = vadd.f32 %v1086, %v1262
    %v1350 = vadd.f32 %v1087, %v1267
    %v1351 = vadd.f32 %v1088, %v1270
    %v1352 = vadd.f32 %v1089, %v1275
    %v1353 = vadd.f32 %v1090, %v1278
    %v1354 = vadd.f32 %v1091, %v1283
    %v1355 = vadd.f32 %v1092, %v1286
    %v1356 = vadd.f32 %v1093, %v1291
    %v1357 = vadd.f32 %v1094, %v1294
    %v1358 = vadd.f32 %v1095, %v1299
    %v1359 = vadd.f32 %v1096, %v1302
    %v1360 = vadd.f32 %v1097, %v1307
    %v1361 = vadd.f32 %v1098, %v1310
    %v1362 = vadd.f32 %v1099, %v1315
    %v1363 = vadd.f32 %v1100, %v1318
    %v1364 = vadd.f32 %v1101, %v1323
    %v1365 = vadd.f32 %v1102, %v1326
    %v1366 = vadd.f32 %v1103, %v1331
    %v1367 = vadd.f32 %v1104, %v1334
    %v1368 = vadd.f32 %v1105, %v1339
    %v1369 = vld [vmem:[#allocation2 + $0xc] sm:$0xff]
    %v1370 = vld [vmem:[#allocation2 + $0x14] sm:$0xff]
    %v1371 = vld [vmem:[#allocation2 + $0x1c] sm:$0xff]
    %v1372 = vld [vmem:[#allocation2 + $0x24] sm:$0xff]
    %v1373 = vld [vmem:[#allocation2 + $0x2c] sm:$0xff]
    %v1374 = vld [vmem:[#allocation2 + $0x34] sm:$0xff]
    %v1375 = vld [vmem:[#allocation2 + $0x3c] sm:$0xff]
    %v1376 = vld [vmem:[#allocation2 + $0x44] sm:$0xff]
    %v1377 = vld [vmem:[#allocation2 + $0x4c] sm:$0xff]
    %v1378 = vld [vmem:[#allocation2 + $0x54] sm:$0xff]
    %v1379 = vld [vmem:[#allocation2 + $0x5c] sm:$0xff]
    %v1380 = vld [vmem:[#allocation2 + $0x64] sm:$0xff]
    %v1381 = vld [vmem:[#allocation2 + $0x6c] sm:$0xff]
    %v1382 = vld [vmem:[#allocation2 + $0x74] sm:$0xff]
    %v1383 = vld [vmem:[#allocation2 + $0x7c] sm:$0xff]
    %v1384 = vld [vmem:[#allocation2 + $0x84] sm:$0xff]
    %v1385 = vld [vmem:[#allocation2 + $0x8c] sm:$0xff]
    %v1386 = vld [vmem:[#allocation2 + $0x94] sm:$0xff]
    %v1387 = vld [vmem:[#allocation2 + $0x9c] sm:$0xff]
    %v1388 = vld [vmem:[#allocation2 + $0xa4] sm:$0xff]
    %v1389 = vld [vmem:[#allocation2 + $0xac] sm:$0xff]
    %v1390 = vld [vmem:[#allocation2 + $0xb4] sm:$0xff]
    %v1391 = vld [vmem:[#allocation2 + $0xbc] sm:$0xff]
    %v1392 = vld [vmem:[#allocation2 + $0xc4] sm:$0xff]
    %v1393 = vld [vmem:[#allocation2 + $0xcc] sm:$0xff]
    %v1394 = vpack.c.bf16 %v1370, %v1369
    %v1395 = vpack.c.bf16 %v1372, %v1371
    %v1396 = vpack.c.bf16 %v1374, %v1373
    %v1397 = vpack.c.bf16 %v1376, %v1375
    %v1398 = vpack.c.bf16 %v1378, %v1377
    %v1399 = vpack.c.bf16 %v1380, %v1379
    %v1400 = vpack.c.bf16 %v1382, %v1381
    %v1401 = vpack.c.bf16 %v1384, %v1383
    %v1402 = vpack.c.bf16 %v1386, %v1385
    %v1403 = vpack.c.bf16 %v1388, %v1387
    %v1404 = vpack.c.bf16 %v1390, %v1389
    %v1405 = vpack.c.bf16 %v1392, %v1391
    %v1406 = vpack.c.bf16 %v1393, %v1393
    %v1407 = vld [vmem:[#allocation5 + $0x140] sm:$0xf]
    %v1408 = vld [vmem:[#allocation5 + $0x144] sm:$0xf]
    %v1409 = vld [vmem:[#allocation5 + $0x148] sm:$0xf]
    %v1410 = vld [vmem:[#allocation5 + $0x14c] sm:$0xf]
    %v1411 = vld [vmem:[#allocation5 + $0x150] sm:$0xf]
    %v1412 = vld [vmem:[#allocation5 + $0x154] sm:$0xf]
    %v1413 = vld [vmem:[#allocation5 + $0x158] sm:$0xf]
    %v1414 = vld [vmem:[#allocation5 + $0x15c] sm:$0xf]
    %v1415 = vld [vmem:[#allocation5 + $0x160] sm:$0xf]
    %v1416 = vld [vmem:[#allocation5 + $0x164] sm:$0xf]
    %v1417 = vld [vmem:[#allocation5 + $0x168] sm:$0xf]
    %v1418 = vld [vmem:[#allocation5 + $0x16c] sm:$0xf]
    %v1419 = vld [vmem:[#allocation5 + $0x170] sm:$0xf]
    %v1420 = vld [vmem:[#allocation5 + $0x174] sm:$0xf]
    %v1421 = vld [vmem:[#allocation5 + $0x178] sm:$0xf]
    %v1422 = vld [vmem:[#allocation5 + $0x17c] sm:$0xf]
    %v1439 = vunpack.c.l.b16 %v1407
    %v1440 = vunpack.c.l.b16 %v1408
    %v1441 = vunpack.c.l.b16 %v1409
    %v1442 = vunpack.c.l.b16 %v1410
    %v1443 = vunpack.c.l.b16 %v1411
    %v1444 = vunpack.c.l.b16 %v1412
    %v1445 = vunpack.c.l.b16 %v1413
    %v1446 = vunpack.c.l.b16 %v1414
    %v1447 = vunpack.c.l.b16 %v1415
    %v1448 = vunpack.c.l.b16 %v1416
    %v1449 = vunpack.c.l.b16 %v1417
    %v1450 = vunpack.c.l.b16 %v1418
    %v1451 = vunpack.c.l.b16 %v1419
    %v1452 = vunpack.c.l.b16 %v1420
    %v1453 = vunpack.c.l.b16 %v1421
    %v1454 = vunpack.c.l.b16 %v1422
    %v1455 = vpack.c.b16 %v1440, %v1439
    %v1456 = vpack.c.b16 %v1442, %v1441
    %v1457 = vpack.c.b16 %v1444, %v1443
    %v1458 = vpack.c.b16 %v1446, %v1445
    %v1459 = vpack.c.b16 %v1448, %v1447
    %v1460 = vpack.c.b16 %v1450, %v1449
    %v1461 = vpack.c.b16 %v1452, %v1451
    %v1462 = vpack.c.b16 %v1454, %v1453
    %1471 = vmatprep.subr.bf16.mxu0 0
    %1472 = vmatpush1.bf16.msra.mxu0 %v1462
    %1473 = vmatprep.subr.bf16.mxu0 0
    %1474 = vmatpush1.bf16.msra.mxu0 %v1461
    %1475 = vmatprep.subr.bf16.mxu0 0
    %1476 = vmatpush1.bf16.msra.mxu0 %v1460
    %1477 = vmatprep.subr.bf16.mxu0 0
    %1478 = vmatpush1.bf16.msra.mxu0 %v1459
    %1479 = vmatprep.subr.bf16.mxu0 0
    %1480 = vmatpush1.bf16.msra.mxu0 %v1458
    %1481 = vmatprep.subr.bf16.mxu0 0
    %1482 = vmatpush1.bf16.msra.mxu0 %v1457
    %1483 = vmatprep.subr.bf16.mxu0 0
    %1484 = vmatpush1.bf16.msra.mxu0 %v1456
    %1485 = vmatprep.subr.bf16.mxu0 0
    %1486 = vmatpush1.bf16.msra.mxu0 %v1455
    %1487 = vmatprep.subr.bf16.mxu0 0
    %1488 = vmatpush2.bf16.msra.mxu0 0
    %1489 = vmatprep.subr.bf16.mxu0 0
    %1490 = vmatpush2.bf16.msra.mxu0 0
    %1491 = vmatprep.subr.bf16.mxu0 0
    %1492 = vmatpush2.bf16.msra.mxu0 0
    %1493 = vmatprep.subr.bf16.mxu0 0
    %1494 = vmatpush2.bf16.msra.mxu0 0
    %1495 = vmatprep.subr.bf16.mxu0 0
    %1496 = vmatpush2.bf16.msra.mxu0 0
    %1497 = vmatprep.subr.bf16.mxu0 0
    %1498 = vmatpush2.bf16.msra.mxu0 0
    %1499 = vmatprep.subr.bf16.mxu0 0
    %1500 = vmatpush2.bf16.msra.mxu0 0
    %1501 = vmatprep.subr.bf16.mxu0 0
    %1502 = vmatpush2.bf16.msra.mxu0 0
    %1503 = vmatprep.mubr.bf16.mxu0 0
    %1504 = vmatmul.mubr.bf16.gmra.mxu0 %v1394
    %v1505 = vpop.f32.mrf.mxu0
    %v1506 = vadd.f32 0.0, %v1505
    %v1507 = vpop.f32.mrf.mxu0
    %v1508 = vpop.f32.mrf.mxu0
    %v1509 = vadd.f32 0.0, %v1508
    %v1510 = vpop.f32.mrf.mxu0
    %1511 = vmatprep.mubr.bf16.mxu0 0
    %1512 = vmatmul.mubr.bf16.gmra.mxu0 %v1395
    %v1513 = vpop.f32.mrf.mxu0
    %v1514 = vadd.f32 0.0, %v1513
    %v1515 = vpop.f32.mrf.mxu0
    %v1516 = vpop.f32.mrf.mxu0
    %v1517 = vadd.f32 0.0, %v1516
    %v1518 = vpop.f32.mrf.mxu0
    %1519 = vmatprep.mubr.bf16.mxu0 0
    %1520 = vmatmul.mubr.bf16.gmra.mxu0 %v1396
    %v1521 = vpop.f32.mrf.mxu0
    %v1522 = vadd.f32 0.0, %v1521
    %v1523 = vpop.f32.mrf.mxu0
    %v1524 = vpop.f32.mrf.mxu0
    %v1525 = vadd.f32 0.0, %v1524
    %v1526 = vpop.f32.mrf.mxu0
    %1527 = vmatprep.mubr.bf16.mxu0 0
    %1528 = vmatmul.mubr.bf16.gmra.mxu0 %v1397
    %v1529 = vpop.f32.mrf.mxu0
    %v1530 = vadd.f32 0.0, %v1529
    %v1531 = vpop.f32.mrf.mxu0
    %v1532 = vpop.f32.mrf.mxu0
    %v1533 = vadd.f32 0.0, %v1532
    %v1534 = vpop.f32.mrf.mxu0
    %1535 = vmatprep.mubr.bf16.mxu0 0
    %1536 = vmatmul.mubr.bf16.gmra.mxu0 %v1398
    %v1537 = vpop.f32.mrf.mxu0
    %v1538 = vadd.f32 0.0, %v1537
    %v1539 = vpop.f32.mrf.mxu0
    %v1540 = vpop.f32.mrf.mxu0
    %v1541 = vadd.f32 0.0, %v1540
    %v1542 = vpop.f32.mrf.mxu0
    %1543 = vmatprep.mubr.bf16.mxu0 0
    %1544 = vmatmul.mubr.bf16.gmra.mxu0 %v1399
    %v1545 = vpop.f32.mrf.mxu0
    %v1546 = vadd.f32 0.0, %v1545
    %v1547 = vpop.f32.mrf.mxu0
    %v1548 = vpop.f32.mrf.mxu0
    %v1549 = vadd.f32 0.0, %v1548
    %v1550 = vpop.f32.mrf.mxu0
    %1551 = vmatprep.mubr.bf16.mxu0 0
    %1552 = vmatmul.mubr.bf16.gmra.mxu0 %v1400
    %v1553 = vpop.f32.mrf.mxu0
    %v1554 = vadd.f32 0.0, %v1553
    %v1555 = vpop.f32.mrf.mxu0
    %v1556 = vpop.f32.mrf.mxu0
    %v1557 = vadd.f32 0.0, %v1556
    %v1558 = vpop.f32.mrf.mxu0
    %1559 = vmatprep.mubr.bf16.mxu0 0
    %1560 = vmatmul.mubr.bf16.gmra.mxu0 %v1401
    %v1561 = vpop.f32.mrf.mxu0
    %v1562 = vadd.f32 0.0, %v1561
    %v1563 = vpop.f32.mrf.mxu0
    %v1564 = vpop.f32.mrf.mxu0
    %v1565 = vadd.f32 0.0, %v1564
    %v1566 = vpop.f32.mrf.mxu0
    %1567 = vmatprep.mubr.bf16.mxu0 0
    %1568 = vmatmul.mubr.bf16.gmra.mxu0 %v1402
    %v1569 = vpop.f32.mrf.mxu0
    %v1570 = vadd.f32 0.0, %v1569
    %v1571 = vpop.f32.mrf.mxu0
    %v1572 = vpop.f32.mrf.mxu0
    %v1573 = vadd.f32 0.0, %v1572
    %v1574 = vpop.f32.mrf.mxu0
    %1575 = vmatprep.mubr.bf16.mxu0 0
    %1576 = vmatmul.mubr.bf16.gmra.mxu0 %v1403
    %v1577 = vpop.f32.mrf.mxu0
    %v1578 = vadd.f32 0.0, %v1577
    %v1579 = vpop.f32.mrf.mxu0
    %v1580 = vpop.f32.mrf.mxu0
    %v1581 = vadd.f32 0.0, %v1580
    %v1582 = vpop.f32.mrf.mxu0
    %1583 = vmatprep.mubr.bf16.mxu0 0
    %1584 = vmatmul.mubr.bf16.gmra.mxu0 %v1404
    %v1585 = vpop.f32.mrf.mxu0
    %v1586 = vadd.f32 0.0, %v1585
    %v1587 = vpop.f32.mrf.mxu0
    %v1588 = vpop.f32.mrf.mxu0
    %v1589 = vadd.f32 0.0, %v1588
    %v1590 = vpop.f32.mrf.mxu0
    %1591 = vmatprep.mubr.bf16.mxu0 0
    %1592 = vmatmul.mubr.bf16.gmra.mxu0 %v1405
    %v1593 = vpop.f32.mrf.mxu0
    %v1594 = vadd.f32 0.0, %v1593
    %v1595 = vpop.f32.mrf.mxu0
    %v1596 = vpop.f32.mrf.mxu0
    %v1597 = vadd.f32 0.0, %v1596
    %v1598 = vpop.f32.mrf.mxu0
    %1599 = vmatprep.mubr.bf16.mxu0 0
    %1600 = vmatmul.mubr.bf16.gmra.mxu0 %v1406
    %v1601 = vpop.f32.mrf.mxu0
    %v1602 = vadd.f32 0.0, %v1601
    %v1603 = vpop.f32.mrf.mxu0
    %v1604 = vpop.f32.mrf.mxu0
    %v1605 = vpop.f32.mrf.mxu0
    %1606 = vdwg.mxu0
    %v1607 = vadd.f32 %v1344, %v1506
    %v1608 = vadd.f32 %v1345, %v1509
    %v1609 = vadd.f32 %v1346, %v1514
    %v1610 = vadd.f32 %v1347, %v1517
    %v1611 = vadd.f32 %v1348, %v1522
    %v1612 = vadd.f32 %v1349, %v1525
    %v1613 = vadd.f32 %v1350, %v1530
    %v1614 = vadd.f32 %v1351, %v1533
    %v1615 = vadd.f32 %v1352, %v1538
    %v1616 = vadd.f32 %v1353, %v1541
    %v1617 = vadd.f32 %v1354, %v1546
    %v1618 = vadd.f32 %v1355, %v1549
    %v1619 = vadd.f32 %v1356, %v1554
    %v1620 = vadd.f32 %v1357, %v1557
    %v1621 = vadd.f32 %v1358, %v1562
    %v1622 = vadd.f32 %v1359, %v1565
    %v1623 = vadd.f32 %v1360, %v1570
    %v1624 = vadd.f32 %v1361, %v1573
    %v1625 = vadd.f32 %v1362, %v1578
    %v1626 = vadd.f32 %v1363, %v1581
    %v1627 = vadd.f32 %v1364, %v1586
    %v1628 = vadd.f32 %v1365, %v1589
    %v1629 = vadd.f32 %v1366, %v1594
    %v1630 = vadd.f32 %v1367, %v1597
    %v1631 = vadd.f32 %v1368, %v1602
    %v1632 = vld [vmem:[#allocation2 + $0x14] sm:$0xff]
    %v1633 = vld [vmem:[#allocation2 + $0x1c] sm:$0xff]
    %v1634 = vld [vmem:[#allocation2 + $0x24] sm:$0xff]
    %v1635 = vld [vmem:[#allocation2 + $0x2c] sm:$0xff]
    %v1636 = vld [vmem:[#allocation2 + $0x34] sm:$0xff]
    %v1637 = vld [vmem:[#allocation2 + $0x3c] sm:$0xff]
    %v1638 = vld [vmem:[#allocation2 + $0x44] sm:$0xff]
    %v1639 = vld [vmem:[#allocation2 + $0x4c] sm:$0xff]
    %v1640 = vld [vmem:[#allocation2 + $0x54] sm:$0xff]
    %v1641 = vld [vmem:[#allocation2 + $0x5c] sm:$0xff]
    %v1642 = vld [vmem:[#allocation2 + $0x64] sm:$0xff]
    %v1643 = vld [vmem:[#allocation2 + $0x6c] sm:$0xff]
    %v1644 = vld [vmem:[#allocation2 + $0x74] sm:$0xff]
    %v1645 = vld [vmem:[#allocation2 + $0x7c] sm:$0xff]
    %v1646 = vld [vmem:[#allocation2 + $0x84] sm:$0xff]
    %v1647 = vld [vmem:[#allocation2 + $0x8c] sm:$0xff]
    %v1648 = vld [vmem:[#allocation2 + $0x94] sm:$0xff]
    %v1649 = vld [vmem:[#allocation2 + $0x9c] sm:$0xff]
    %v1650 = vld [vmem:[#allocation2 + $0xa4] sm:$0xff]
    %v1651 = vld [vmem:[#allocation2 + $0xac] sm:$0xff]
    %v1652 = vld [vmem:[#allocation2 + $0xb4] sm:$0xff]
    %v1653 = vld [vmem:[#allocation2 + $0xbc] sm:$0xff]
    %v1654 = vld [vmem:[#allocation2 + $0xc4] sm:$0xff]
    %v1655 = vld [vmem:[#allocation2 + $0xcc] sm:$0xff]
    %v1656 = vld [vmem:[#allocation2 + $0xd4] sm:$0xff]
    %v1657 = vpack.c.bf16 %v1633, %v1632
    %v1658 = vpack.c.bf16 %v1635, %v1634
    %v1659 = vpack.c.bf16 %v1637, %v1636
    %v1660 = vpack.c.bf16 %v1639, %v1638
    %v1661 = vpack.c.bf16 %v1641, %v1640
    %v1662 = vpack.c.bf16 %v1643, %v1642
    %v1663 = vpack.c.bf16 %v1645, %v1644
    %v1664 = vpack.c.bf16 %v1647, %v1646
    %v1665 = vpack.c.bf16 %v1649, %v1648
    %v1666 = vpack.c.bf16 %v1651, %v1650
    %v1667 = vpack.c.bf16 %v1653, %v1652
    %v1668 = vpack.c.bf16 %v1655, %v1654
    %v1669 = vpack.c.bf16 %v1656, %v1656
    %v1670 = vld [vmem:[#allocation5 + $0x180] sm:$0xf]
    %v1671 = vld [vmem:[#allocation5 + $0x184] sm:$0xf]
    %v1672 = vld [vmem:[#allocation5 + $0x188] sm:$0xf]
    %v1673 = vld [vmem:[#allocation5 + $0x18c] sm:$0xf]
    %v1674 = vld [vmem:[#allocation5 + $0x190] sm:$0xf]
    %v1675 = vld [vmem:[#allocation5 + $0x194] sm:$0xf]
    %v1676 = vld [vmem:[#allocation5 + $0x198] sm:$0xf]
    %v1677 = vld [vmem:[#allocation5 + $0x19c] sm:$0xf]
    %v1678 = vld [vmem:[#allocation5 + $0x1a0] sm:$0xf]
    %v1679 = vld [vmem:[#allocation5 + $0x1a4] sm:$0xf]
    %v1680 = vld [vmem:[#allocation5 + $0x1a8] sm:$0xf]
    %v1681 = vld [vmem:[#allocation5 + $0x1ac] sm:$0xf]
    %v1682 = vld [vmem:[#allocation5 + $0x1b0] sm:$0xf]
    %v1683 = vld [vmem:[#allocation5 + $0x1b4] sm:$0xf]
    %v1684 = vld [vmem:[#allocation5 + $0x1b8] sm:$0xf]
    %v1685 = vld [vmem:[#allocation5 + $0x1bc] sm:$0xf]
    %v1702 = vunpack.c.l.b16 %v1670
    %v1703 = vunpack.c.l.b16 %v1671
    %v1704 = vunpack.c.l.b16 %v1672
    %v1705 = vunpack.c.l.b16 %v1673
    %v1706 = vunpack.c.l.b16 %v1674
    %v1707 = vunpack.c.l.b16 %v1675
    %v1708 = vunpack.c.l.b16 %v1676
    %v1709 = vunpack.c.l.b16 %v1677
    %v1710 = vunpack.c.l.b16 %v1678
    %v1711 = vunpack.c.l.b16 %v1679
    %v1712 = vunpack.c.l.b16 %v1680
    %v1713 = vunpack.c.l.b16 %v1681
    %v1714 = vunpack.c.l.b16 %v1682
    %v1715 = vunpack.c.l.b16 %v1683
    %v1716 = vunpack.c.l.b16 %v1684
    %v1717 = vunpack.c.l.b16 %v1685
    %v1718 = vpack.c.b16 %v1703, %v1702
    %v1719 = vpack.c.b16 %v1705, %v1704
    %v1720 = vpack.c.b16 %v1707, %v1706
    %v1721 = vpack.c.b16 %v1709, %v1708
    %v1722 = vpack.c.b16 %v1711, %v1710
    %v1723 = vpack.c.b16 %v1713, %v1712
    %v1724 = vpack.c.b16 %v1715, %v1714
    %v1725 = vpack.c.b16 %v1717, %v1716
    %1734 = vmatprep.subr.bf16.mxu0 0
    %1735 = vmatpush1.bf16.msra.mxu0 %v1725
    %1736 = vmatprep.subr.bf16.mxu0 0
    %1737 = vmatpush1.bf16.msra.mxu0 %v1724
    %1738 = vmatprep.subr.bf16.mxu0 0
    %1739 = vmatpush1.bf16.msra.mxu0 %v1723
    %1740 = vmatprep.subr.bf16.mxu0 0
    %1741 = vmatpush1.bf16.msra.mxu0 %v1722
    %1742 = vmatprep.subr.bf16.mxu0 0
    %1743 = vmatpush1.bf16.msra.mxu0 %v1721
    %1744 = vmatprep.subr.bf16.mxu0 0
    %1745 = vmatpush1.bf16.msra.mxu0 %v1720
    %1746 = vmatprep.subr.bf16.mxu0 0
    %1747 = vmatpush1.bf16.msra.mxu0 %v1719
    %1748 = vmatprep.subr.bf16.mxu0 0
    %1749 = vmatpush1.bf16.msra.mxu0 %v1718
    %1750 = vmatprep.subr.bf16.mxu0 0
    %1751 = vmatpush2.bf16.msra.mxu0 0
    %1752 = vmatprep.subr.bf16.mxu0 0
    %1753 = vmatpush2.bf16.msra.mxu0 0
    %1754 = vmatprep.subr.bf16.mxu0 0
    %1755 = vmatpush2.bf16.msra.mxu0 0
    %1756 = vmatprep.subr.bf16.mxu0 0
    %1757 = vmatpush2.bf16.msra.mxu0 0
    %1758 = vmatprep.subr.bf16.mxu0 0
    %1759 = vmatpush2.bf16.msra.mxu0 0
    %1760 = vmatprep.subr.bf16.mxu0 0
    %1761 = vmatpush2.bf16.msra.mxu0 0
    %1762 = vmatprep.subr.bf16.mxu0 0
    %1763 = vmatpush2.bf16.msra.mxu0 0
    %1764 = vmatprep.subr.bf16.mxu0 0
    %1765 = vmatpush2.bf16.msra.mxu0 0
    %1766 = vmatprep.mubr.bf16.mxu0 0
    %1767 = vmatmul.mubr.bf16.gmra.mxu0 %v1657
    %v1768 = vpop.f32.mrf.mxu0
    %v1769 = vadd.f32 0.0, %v1768
    %v1770 = vpop.f32.mrf.mxu0
    %v1771 = vpop.f32.mrf.mxu0
    %v1772 = vadd.f32 0.0, %v1771
    %v1773 = vpop.f32.mrf.mxu0
    %1774 = vmatprep.mubr.bf16.mxu0 0
    %1775 = vmatmul.mubr.bf16.gmra.mxu0 %v1658
    %v1776 = vpop.f32.mrf.mxu0
    %v1777 = vadd.f32 0.0, %v1776
    %v1778 = vpop.f32.mrf.mxu0
    %v1779 = vpop.f32.mrf.mxu0
    %v1780 = vadd.f32 0.0, %v1779
    %v1781 = vpop.f32.mrf.mxu0
    %1782 = vmatprep.mubr.bf16.mxu0 0
    %1783 = vmatmul.mubr.bf16.gmra.mxu0 %v1659
    %v1784 = vpop.f32.mrf.mxu0
    %v1785 = vadd.f32 0.0, %v1784
    %v1786 = vpop.f32.mrf.mxu0
    %v1787 = vpop.f32.mrf.mxu0
    %v1788 = vadd.f32 0.0, %v1787
    %v1789 = vpop.f32.mrf.mxu0
    %1790 = vmatprep.mubr.bf16.mxu0 0
    %1791 = vmatmul.mubr.bf16.gmra.mxu0 %v1660
    %v1792 = vpop.f32.mrf.mxu0
    %v1793 = vadd.f32 0.0, %v1792
    %v1794 = vpop.f32.mrf.mxu0
    %v1795 = vpop.f32.mrf.mxu0
    %v1796 = vadd.f32 0.0, %v1795
    %v1797 = vpop.f32.mrf.mxu0
    %1798 = vmatprep.mubr.bf16.mxu0 0
    %1799 = vmatmul.mubr.bf16.gmra.mxu0 %v1661
    %v1800 = vpop.f32.mrf.mxu0
    %v1801 = vadd.f32 0.0, %v1800
    %v1802 = vpop.f32.mrf.mxu0
    %v1803 = vpop.f32.mrf.mxu0
    %v1804 = vadd.f32 0.0, %v1803
    %v1805 = vpop.f32.mrf.mxu0
    %1806 = vmatprep.mubr.bf16.mxu0 0
    %1807 = vmatmul.mubr.bf16.gmra.mxu0 %v1662
    %v1808 = vpop.f32.mrf.mxu0
    %v1809 = vadd.f32 0.0, %v1808
    %v1810 = vpop.f32.mrf.mxu0
    %v1811 = vpop.f32.mrf.mxu0
    %v1812 = vadd.f32 0.0, %v1811
    %v1813 = vpop.f32.mrf.mxu0
    %1814 = vmatprep.mubr.bf16.mxu0 0
    %1815 = vmatmul.mubr.bf16.gmra.mxu0 %v1663
    %v1816 = vpop.f32.mrf.mxu0
    %v1817 = vadd.f32 0.0, %v1816
    %v1818 = vpop.f32.mrf.mxu0
    %v1819 = vpop.f32.mrf.mxu0
    %v1820 = vadd.f32 0.0, %v1819
    %v1821 = vpop.f32.mrf.mxu0
    %1822 = vmatprep.mubr.bf16.mxu0 0
    %1823 = vmatmul.mubr.bf16.gmra.mxu0 %v1664
    %v1824 = vpop.f32.mrf.mxu0
    %v1825 = vadd.f32 0.0, %v1824
    %v1826 = vpop.f32.mrf.mxu0
    %v1827 = vpop.f32.mrf.mxu0
    %v1828 = vadd.f32 0.0, %v1827
    %v1829 = vpop.f32.mrf.mxu0
    %1830 = vmatprep.mubr.bf16.mxu0 0
    %1831 = vmatmul.mubr.bf16.gmra.mxu0 %v1665
    %v1832 = vpop.f32.mrf.mxu0
    %v1833 = vadd.f32 0.0, %v1832
    %v1834 = vpop.f32.mrf.mxu0
    %v1835 = vpop.f32.mrf.mxu0
    %v1836 = vadd.f32 0.0, %v1835
    %v1837 = vpop.f32.mrf.mxu0
    %1838 = vmatprep.mubr.bf16.mxu0 0
    %1839 = vmatmul.mubr.bf16.gmra.mxu0 %v1666
    %v1840 = vpop.f32.mrf.mxu0
    %v1841 = vadd.f32 0.0, %v1840
    %v1842 = vpop.f32.mrf.mxu0
    %v1843 = vpop.f32.mrf.mxu0
    %v1844 = vadd.f32 0.0, %v1843
    %v1845 = vpop.f32.mrf.mxu0
    %1846 = vmatprep.mubr.bf16.mxu0 0
    %1847 = vmatmul.mubr.bf16.gmra.mxu0 %v1667
    %v1848 = vpop.f32.mrf.mxu0
    %v1849 = vadd.f32 0.0, %v1848
    %v1850 = vpop.f32.mrf.mxu0
    %v1851 = vpop.f32.mrf.mxu0
    %v1852 = vadd.f32 0.0, %v1851
    %v1853 = vpop.f32.mrf.mxu0
    %1854 = vmatprep.mubr.bf16.mxu0 0
    %1855 = vmatmul.mubr.bf16.gmra.mxu0 %v1668
    %v1856 = vpop.f32.mrf.mxu0
    %v1857 = vadd.f32 0.0, %v1856
    %v1858 = vpop.f32.mrf.mxu0
    %v1859 = vpop.f32.mrf.mxu0
    %v1860 = vadd.f32 0.0, %v1859
    %v1861 = vpop.f32.mrf.mxu0
    %1862 = vmatprep.mubr.bf16.mxu0 0
    %1863 = vmatmul.mubr.bf16.gmra.mxu0 %v1669
    %v1864 = vpop.f32.mrf.mxu0
    %v1865 = vadd.f32 0.0, %v1864
    %v1866 = vpop.f32.mrf.mxu0
    %v1867 = vpop.f32.mrf.mxu0
    %v1868 = vpop.f32.mrf.mxu0
    %1869 = vdwg.mxu0
    %v1870 = vadd.f32 %v1607, %v1769
    %v1871 = vadd.f32 %v1608, %v1772
    %v1872 = vadd.f32 %v1609, %v1777
    %v1873 = vadd.f32 %v1610, %v1780
    %v1874 = vadd.f32 %v1611, %v1785
    %v1875 = vadd.f32 %v1612, %v1788
    %v1876 = vadd.f32 %v1613, %v1793
    %v1877 = vadd.f32 %v1614, %v1796
    %v1878 = vadd.f32 %v1615, %v1801
    %v1879 = vadd.f32 %v1616, %v1804
    %v1880 = vadd.f32 %v1617, %v1809
    %v1881 = vadd.f32 %v1618, %v1812
    %v1882 = vadd.f32 %v1619, %v1817
    %v1883 = vadd.f32 %v1620, %v1820
    %v1884 = vadd.f32 %v1621, %v1825
    %v1885 = vadd.f32 %v1622, %v1828
    %v1886 = vadd.f32 %v1623, %v1833
    %v1887 = vadd.f32 %v1624, %v1836
    %v1888 = vadd.f32 %v1625, %v1841
    %v1889 = vadd.f32 %v1626, %v1844
    %v1890 = vadd.f32 %v1627, %v1849
    %v1891 = vadd.f32 %v1628, %v1852
    %v1892 = vadd.f32 %v1629, %v1857
    %v1893 = vadd.f32 %v1630, %v1860
    %v1894 = vadd.f32 %v1631, %v1865
    %v1895 = vld [vmem:[#allocation2 + $0x15] sm:$0xff]
    %v1896 = vld [vmem:[#allocation2 + $0x1d] sm:$0xff]
    %v1897 = vld [vmem:[#allocation2 + $0x25] sm:$0xff]
    %v1898 = vld [vmem:[#allocation2 + $0x2d] sm:$0xff]
    %v1899 = vld [vmem:[#allocation2 + $0x35] sm:$0xff]
    %v1900 = vld [vmem:[#allocation2 + $0x3d] sm:$0xff]
    %v1901 = vld [vmem:[#allocation2 + $0x45] sm:$0xff]
    %v1902 = vld [vmem:[#allocation2 + $0x4d] sm:$0xff]
    %v1903 = vld [vmem:[#allocation2 + $0x55] sm:$0xff]
    %v1904 = vld [vmem:[#allocation2 + $0x5d] sm:$0xff]
    %v1905 = vld [vmem:[#allocation2 + $0x65] sm:$0xff]
    %v1906 = vld [vmem:[#allocation2 + $0x6d] sm:$0xff]
    %v1907 = vld [vmem:[#allocation2 + $0x75] sm:$0xff]
    %v1908 = vld [vmem:[#allocation2 + $0x7d] sm:$0xff]
    %v1909 = vld [vmem:[#allocation2 + $0x85] sm:$0xff]
    %v1910 = vld [vmem:[#allocation2 + $0x8d] sm:$0xff]
    %v1911 = vld [vmem:[#allocation2 + $0x95] sm:$0xff]
    %v1912 = vld [vmem:[#allocation2 + $0x9d] sm:$0xff]
    %v1913 = vld [vmem:[#allocation2 + $0xa5] sm:$0xff]
    %v1914 = vld [vmem:[#allocation2 + $0xad] sm:$0xff]
    %v1915 = vld [vmem:[#allocation2 + $0xb5] sm:$0xff]
    %v1916 = vld [vmem:[#allocation2 + $0xbd] sm:$0xff]
    %v1917 = vld [vmem:[#allocation2 + $0xc5] sm:$0xff]
    %v1918 = vld [vmem:[#allocation2 + $0xcd] sm:$0xff]
    %v1919 = vld [vmem:[#allocation2 + $0xd5] sm:$0xff]
    %v1920 = vpack.c.bf16 %v1896, %v1895
    %v1921 = vpack.c.bf16 %v1898, %v1897
    %v1922 = vpack.c.bf16 %v1900, %v1899
    %v1923 = vpack.c.bf16 %v1902, %v1901
    %v1924 = vpack.c.bf16 %v1904, %v1903
    %v1925 = vpack.c.bf16 %v1906, %v1905
    %v1926 = vpack.c.bf16 %v1908, %v1907
    %v1927 = vpack.c.bf16 %v1910, %v1909
    %v1928 = vpack.c.bf16 %v1912, %v1911
    %v1929 = vpack.c.bf16 %v1914, %v1913
    %v1930 = vpack.c.bf16 %v1916, %v1915
    %v1931 = vpack.c.bf16 %v1918, %v1917
    %v1932 = vpack.c.bf16 %v1919, %v1919
    %v1933 = vld [vmem:[#allocation5 + $0x1c0] sm:$0xf]
    %v1934 = vld [vmem:[#allocation5 + $0x1c4] sm:$0xf]
    %v1935 = vld [vmem:[#allocation5 + $0x1c8] sm:$0xf]
    %v1936 = vld [vmem:[#allocation5 + $0x1cc] sm:$0xf]
    %v1937 = vld [vmem:[#allocation5 + $0x1d0] sm:$0xf]
    %v1938 = vld [vmem:[#allocation5 + $0x1d4] sm:$0xf]
    %v1939 = vld [vmem:[#allocation5 + $0x1d8] sm:$0xf]
    %v1940 = vld [vmem:[#allocation5 + $0x1dc] sm:$0xf]
    %v1941 = vld [vmem:[#allocation5 + $0x1e0] sm:$0xf]
    %v1942 = vld [vmem:[#allocation5 + $0x1e4] sm:$0xf]
    %v1943 = vld [vmem:[#allocation5 + $0x1e8] sm:$0xf]
    %v1944 = vld [vmem:[#allocation5 + $0x1ec] sm:$0xf]
    %v1945 = vld [vmem:[#allocation5 + $0x1f0] sm:$0xf]
    %v1946 = vld [vmem:[#allocation5 + $0x1f4] sm:$0xf]
    %v1947 = vld [vmem:[#allocation5 + $0x1f8] sm:$0xf]
    %v1948 = vld [vmem:[#allocation5 + $0x1fc] sm:$0xf]
    %v1965 = vunpack.c.l.b16 %v1933
    %v1966 = vunpack.c.l.b16 %v1934
    %v1967 = vunpack.c.l.b16 %v1935
    %v1968 = vunpack.c.l.b16 %v1936
    %v1969 = vunpack.c.l.b16 %v1937
    %v1970 = vunpack.c.l.b16 %v1938
    %v1971 = vunpack.c.l.b16 %v1939
    %v1972 = vunpack.c.l.b16 %v1940
    %v1973 = vunpack.c.l.b16 %v1941
    %v1974 = vunpack.c.l.b16 %v1942
    %v1975 = vunpack.c.l.b16 %v1943
    %v1976 = vunpack.c.l.b16 %v1944
    %v1977 = vunpack.c.l.b16 %v1945
    %v1978 = vunpack.c.l.b16 %v1946
    %v1979 = vunpack.c.l.b16 %v1947
    %v1980 = vunpack.c.l.b16 %v1948
    %v1981 = vpack.c.b16 %v1966, %v1965
    %v1982 = vpack.c.b16 %v1968, %v1967
    %v1983 = vpack.c.b16 %v1970, %v1969
    %v1984 = vpack.c.b16 %v1972, %v1971
    %v1985 = vpack.c.b16 %v1974, %v1973
    %v1986 = vpack.c.b16 %v1976, %v1975
    %v1987 = vpack.c.b16 %v1978, %v1977
    %v1988 = vpack.c.b16 %v1980, %v1979
    %1997 = vmatprep.subr.bf16.mxu0 0
    %1998 = vmatpush1.bf16.msra.mxu0 %v1988
    %1999 = vmatprep.subr.bf16.mxu0 0
    %2000 = vmatpush1.bf16.msra.mxu0 %v1987
    %2001 = vmatprep.subr.bf16.mxu0 0
    %2002 = vmatpush1.bf16.msra.mxu0 %v1986
    %2003 = vmatprep.subr.bf16.mxu0 0
    %2004 = vmatpush1.bf16.msra.mxu0 %v1985
    %2005 = vmatprep.subr.bf16.mxu0 0
    %2006 = vmatpush1.bf16.msra.mxu0 %v1984
    %2007 = vmatprep.subr.bf16.mxu0 0
    %2008 = vmatpush1.bf16.msra.mxu0 %v1983
    %2009 = vmatprep.subr.bf16.mxu0 0
    %2010 = vmatpush1.bf16.msra.mxu0 %v1982
    %2011 = vmatprep.subr.bf16.mxu0 0
    %2012 = vmatpush1.bf16.msra.mxu0 %v1981
    %2013 = vmatprep.subr.bf16.mxu0 0
    %2014 = vmatpush2.bf16.msra.mxu0 0
    %2015 = vmatprep.subr.bf16.mxu0 0
    %2016 = vmatpush2.bf16.msra.mxu0 0
    %2017 = vmatprep.subr.bf16.mxu0 0
    %2018 = vmatpush2.bf16.msra.mxu0 0
    %2019 = vmatprep.subr.bf16.mxu0 0
    %2020 = vmatpush2.bf16.msra.mxu0 0
    %2021 = vmatprep.subr.bf16.mxu0 0
    %2022 = vmatpush2.bf16.msra.mxu0 0
    %2023 = vmatprep.subr.bf16.mxu0 0
    %2024 = vmatpush2.bf16.msra.mxu0 0
    %2025 = vmatprep.subr.bf16.mxu0 0
    %2026 = vmatpush2.bf16.msra.mxu0 0
    %2027 = vmatprep.subr.bf16.mxu0 0
    %2028 = vmatpush2.bf16.msra.mxu0 0
    %2029 = vmatprep.mubr.bf16.mxu0 0
    %2030 = vmatmul.mubr.bf16.gmra.mxu0 %v1920
    %v2031 = vpop.f32.mrf.mxu0
    %v2032 = vadd.f32 0.0, %v2031
    %v2033 = vpop.f32.mrf.mxu0
    %v2034 = vpop.f32.mrf.mxu0
    %v2035 = vadd.f32 0.0, %v2034
    %v2036 = vpop.f32.mrf.mxu0
    %2037 = vmatprep.mubr.bf16.mxu0 0
    %2038 = vmatmul.mubr.bf16.gmra.mxu0 %v1921
    %v2039 = vpop.f32.mrf.mxu0
    %v2040 = vadd.f32 0.0, %v2039
    %v2041 = vpop.f32.mrf.mxu0
    %v2042 = vpop.f32.mrf.mxu0
    %v2043 = vadd.f32 0.0, %v2042
    %v2044 = vpop.f32.mrf.mxu0
    %2045 = vmatprep.mubr.bf16.mxu0 0
    %2046 = vmatmul.mubr.bf16.gmra.mxu0 %v1922
    %v2047 = vpop.f32.mrf.mxu0
    %v2048 = vadd.f32 0.0, %v2047
    %v2049 = vpop.f32.mrf.mxu0
    %v2050 = vpop.f32.mrf.mxu0
    %v2051 = vadd.f32 0.0, %v2050
    %v2052 = vpop.f32.mrf.mxu0
    %2053 = vmatprep.mubr.bf16.mxu0 0
    %2054 = vmatmul.mubr.bf16.gmra.mxu0 %v1923
    %v2055 = vpop.f32.mrf.mxu0
    %v2056 = vadd.f32 0.0, %v2055
    %v2057 = vpop.f32.mrf.mxu0
    %v2058 = vpop.f32.mrf.mxu0
    %v2059 = vadd.f32 0.0, %v2058
    %v2060 = vpop.f32.mrf.mxu0
    %2061 = vmatprep.mubr.bf16.mxu0 0
    %2062 = vmatmul.mubr.bf16.gmra.mxu0 %v1924
    %v2063 = vpop.f32.mrf.mxu0
    %v2064 = vadd.f32 0.0, %v2063
    %v2065 = vpop.f32.mrf.mxu0
    %v2066 = vpop.f32.mrf.mxu0
    %v2067 = vadd.f32 0.0, %v2066
    %v2068 = vpop.f32.mrf.mxu0
    %2069 = vmatprep.mubr.bf16.mxu0 0
    %2070 = vmatmul.mubr.bf16.gmra.mxu0 %v1925
    %v2071 = vpop.f32.mrf.mxu0
    %v2072 = vadd.f32 0.0, %v2071
    %v2073 = vpop.f32.mrf.mxu0
    %v2074 = vpop.f32.mrf.mxu0
    %v2075 = vadd.f32 0.0, %v2074
    %v2076 = vpop.f32.mrf.mxu0
    %2077 = vmatprep.mubr.bf16.mxu0 0
    %2078 = vmatmul.mubr.bf16.gmra.mxu0 %v1926
    %v2079 = vpop.f32.mrf.mxu0
    %v2080 = vadd.f32 0.0, %v2079
    %v2081 = vpop.f32.mrf.mxu0
    %v2082 = vpop.f32.mrf.mxu0
    %v2083 = vadd.f32 0.0, %v2082
    %v2084 = vpop.f32.mrf.mxu0
    %2085 = vmatprep.mubr.bf16.mxu0 0
    %2086 = vmatmul.mubr.bf16.gmra.mxu0 %v1927
    %v2087 = vpop.f32.mrf.mxu0
    %v2088 = vadd.f32 0.0, %v2087
    %v2089 = vpop.f32.mrf.mxu0
    %v2090 = vpop.f32.mrf.mxu0
    %v2091 = vadd.f32 0.0, %v2090
    %v2092 = vpop.f32.mrf.mxu0
    %2093 = vmatprep.mubr.bf16.mxu0 0
    %2094 = vmatmul.mubr.bf16.gmra.mxu0 %v1928
    %v2095 = vpop.f32.mrf.mxu0
    %v2096 = vadd.f32 0.0, %v2095
    %v2097 = vpop.f32.mrf.mxu0
    %v2098 = vpop.f32.mrf.mxu0
    %v2099 = vadd.f32 0.0, %v2098
    %v2100 = vpop.f32.mrf.mxu0
    %2101 = vmatprep.mubr.bf16.mxu0 0
    %2102 = vmatmul.mubr.bf16.gmra.mxu0 %v1929
    %v2103 = vpop.f32.mrf.mxu0
    %v2104 = vadd.f32 0.0, %v2103
    %v2105 = vpop.f32.mrf.mxu0
    %v2106 = vpop.f32.mrf.mxu0
    %v2107 = vadd.f32 0.0, %v2106
    %v2108 = vpop.f32.mrf.mxu0
    %2109 = vmatprep.mubr.bf16.mxu0 0
    %2110 = vmatmul.mubr.bf16.gmra.mxu0 %v1930
    %v2111 = vpop.f32.mrf.mxu0
    %v2112 = vadd.f32 0.0, %v2111
    %v2113 = vpop.f32.mrf.mxu0
    %v2114 = vpop.f32.mrf.mxu0
    %v2115 = vadd.f32 0.0, %v2114
    %v2116 = vpop.f32.mrf.mxu0
    %2117 = vmatprep.mubr.bf16.mxu0 0
    %2118 = vmatmul.mubr.bf16.gmra.mxu0 %v1931
    %v2119 = vpop.f32.mrf.mxu0
    %v2120 = vadd.f32 0.0, %v2119
    %v2121 = vpop.f32.mrf.mxu0
    %v2122 = vpop.f32.mrf.mxu0
    %v2123 = vadd.f32 0.0, %v2122
    %v2124 = vpop.f32.mrf.mxu0
    %2125 = vmatprep.mubr.bf16.mxu0 0
    %2126 = vmatmul.mubr.bf16.gmra.mxu0 %v1932
    %v2127 = vpop.f32.mrf.mxu0
    %v2128 = vadd.f32 0.0, %v2127
    %v2129 = vpop.f32.mrf.mxu0
    %v2130 = vpop.f32.mrf.mxu0
    %v2131 = vpop.f32.mrf.mxu0
    %2132 = vdwg.mxu0
    %v2133 = vadd.f32 %v1870, %v2032
    %v2134 = vadd.f32 %v1871, %v2035
    %v2135 = vadd.f32 %v1872, %v2040
    %v2136 = vadd.f32 %v1873, %v2043
    %v2137 = vadd.f32 %v1874, %v2048
    %v2138 = vadd.f32 %v1875, %v2051
    %v2139 = vadd.f32 %v1876, %v2056
    %v2140 = vadd.f32 %v1877, %v2059
    %v2141 = vadd.f32 %v1878, %v2064
    %v2142 = vadd.f32 %v1879, %v2067
    %v2143 = vadd.f32 %v1880, %v2072
    %v2144 = vadd.f32 %v1881, %v2075
    %v2145 = vadd.f32 %v1882, %v2080
    %v2146 = vadd.f32 %v1883, %v2083
    %v2147 = vadd.f32 %v1884, %v2088
    %v2148 = vadd.f32 %v1885, %v2091
    %v2149 = vadd.f32 %v1886, %v2096
    %v2150 = vadd.f32 %v1887, %v2099
    %v2151 = vadd.f32 %v1888, %v2104
    %v2152 = vadd.f32 %v1889, %v2107
    %v2153 = vadd.f32 %v1890, %v2112
    %v2154 = vadd.f32 %v1891, %v2115
    %v2155 = vadd.f32 %v1892, %v2120
    %v2156 = vadd.f32 %v1893, %v2123
    %v2157 = vadd.f32 %v1894, %v2128
    %v2158 = vld [vmem:[#allocation2 + $0x16] sm:$0xff]
    %v2159 = vld [vmem:[#allocation2 + $0x1e] sm:$0xff]
    %v2160 = vld [vmem:[#allocation2 + $0x26] sm:$0xff]
    %v2161 = vld [vmem:[#allocation2 + $0x2e] sm:$0xff]
    %v2162 = vld [vmem:[#allocation2 + $0x36] sm:$0xff]
    %v2163 = vld [vmem:[#allocation2 + $0x3e] sm:$0xff]
    %v2164 = vld [vmem:[#allocation2 + $0x46] sm:$0xff]
    %v2165 = vld [vmem:[#allocation2 + $0x4e] sm:$0xff]
    %v2166 = vld [vmem:[#allocation2 + $0x56] sm:$0xff]
    %v2167 = vld [vmem:[#allocation2 + $0x5e] sm:$0xff]
    %v2168 = vld [vmem:[#allocation2 + $0x66] sm:$0xff]
    %v2169 = vld [vmem:[#allocation2 + $0x6e] sm:$0xff]
    %v2170 = vld [vmem:[#allocation2 + $0x76] sm:$0xff]
    %v2171 = vld [vmem:[#allocation2 + $0x7e] sm:$0xff]
    %v2172 = vld [vmem:[#allocation2 + $0x86] sm:$0xff]
    %v2173 = vld [vmem:[#allocation2 + $0x8e] sm:$0xff]
    %v2174 = vld [vmem:[#allocation2 + $0x96] sm:$0xff]
    %v2175 = vld [vmem:[#allocation2 + $0x9e] sm:$0xff]
    %v2176 = vld [vmem:[#allocation2 + $0xa6] sm:$0xff]
    %v2177 = vld [vmem:[#allocation2 + $0xae] sm:$0xff]
    %v2178 = vld [vmem:[#allocation2 + $0xb6] sm:$0xff]
    %v2179 = vld [vmem:[#allocation2 + $0xbe] sm:$0xff]
    %v2180 = vld [vmem:[#allocation2 + $0xc6] sm:$0xff]
    %v2181 = vld [vmem:[#allocation2 + $0xce] sm:$0xff]
    %v2182 = vld [vmem:[#allocation2 + $0xd6] sm:$0xff]
    %v2183 = vpack.c.bf16 %v2159, %v2158
    %v2184 = vpack.c.bf16 %v2161, %v2160
    %v2185 = vpack.c.bf16 %v2163, %v2162
    %v2186 = vpack.c.bf16 %v2165, %v2164
    %v2187 = vpack.c.bf16 %v2167, %v2166
    %v2188 = vpack.c.bf16 %v2169, %v2168
    %v2189 = vpack.c.bf16 %v2171, %v2170
    %v2190 = vpack.c.bf16 %v2173, %v2172
    %v2191 = vpack.c.bf16 %v2175, %v2174
    %v2192 = vpack.c.bf16 %v2177, %v2176
    %v2193 = vpack.c.bf16 %v2179, %v2178
    %v2194 = vpack.c.bf16 %v2181, %v2180
    %v2195 = vpack.c.bf16 %v2182, %v2182
    %v2196 = vld [vmem:[#allocation5 + $0x200] sm:$0xf]
    %v2197 = vld [vmem:[#allocation5 + $0x204] sm:$0xf]
    %v2198 = vld [vmem:[#allocation5 + $0x208] sm:$0xf]
    %v2199 = vld [vmem:[#allocation5 + $0x20c] sm:$0xf]
    %v2200 = vld [vmem:[#allocation5 + $0x210] sm:$0xf]
    %v2201 = vld [vmem:[#allocation5 + $0x214] sm:$0xf]
    %v2202 = vld [vmem:[#allocation5 + $0x218] sm:$0xf]
    %v2203 = vld [vmem:[#allocation5 + $0x21c] sm:$0xf]
    %v2204 = vld [vmem:[#allocation5 + $0x220] sm:$0xf]
    %v2205 = vld [vmem:[#allocation5 + $0x224] sm:$0xf]
    %v2206 = vld [vmem:[#allocation5 + $0x228] sm:$0xf]
    %v2207 = vld [vmem:[#allocation5 + $0x22c] sm:$0xf]
    %v2208 = vld [vmem:[#allocation5 + $0x230] sm:$0xf]
    %v2209 = vld [vmem:[#allocation5 + $0x234] sm:$0xf]
    %v2210 = vld [vmem:[#allocation5 + $0x238] sm:$0xf]
    %v2211 = vld [vmem:[#allocation5 + $0x23c] sm:$0xf]
    %v2228 = vunpack.c.l.b16 %v2196
    %v2229 = vunpack.c.l.b16 %v2197
    %v2230 = vunpack.c.l.b16 %v2198
    %v2231 = vunpack.c.l.b16 %v2199
    %v2232 = vunpack.c.l.b16 %v2200
    %v2233 = vunpack.c.l.b16 %v2201
    %v2234 = vunpack.c.l.b16 %v2202
    %v2235 = vunpack.c.l.b16 %v2203
    %v2236 = vunpack.c.l.b16 %v2204
    %v2237 = vunpack.c.l.b16 %v2205
    %v2238 = vunpack.c.l.b16 %v2206
    %v2239 = vunpack.c.l.b16 %v2207
    %v2240 = vunpack.c.l.b16 %v2208
    %v2241 = vunpack.c.l.b16 %v2209
    %v2242 = vunpack.c.l.b16 %v2210
    %v2243 = vunpack.c.l.b16 %v2211
    %v2244 = vpack.c.b16 %v2229, %v2228
    %v2245 = vpack.c.b16 %v2231, %v2230
    %v2246 = vpack.c.b16 %v2233, %v2232
    %v2247 = vpack.c.b16 %v2235, %v2234
    %v2248 = vpack.c.b16 %v2237, %v2236
    %v2249 = vpack.c.b16 %v2239, %v2238
    %v2250 = vpack.c.b16 %v2241, %v2240
    %v2251 = vpack.c.b16 %v2243, %v2242
    %2260 = vmatprep.subr.bf16.mxu0 0
    %2261 = vmatpush1.bf16.msra.mxu0 %v2251
    %2262 = vmatprep.subr.bf16.mxu0 0
    %2263 = vmatpush1.bf16.msra.mxu0 %v2250
    %2264 = vmatprep.subr.bf16.mxu0 0
    %2265 = vmatpush1.bf16.msra.mxu0 %v2249
    %2266 = vmatprep.subr.bf16.mxu0 0
    %2267 = vmatpush1.bf16.msra.mxu0 %v2248
    %2268 = vmatprep.subr.bf16.mxu0 0
    %2269 = vmatpush1.bf16.msra.mxu0 %v2247
    %2270 = vmatprep.subr.bf16.mxu0 0
    %2271 = vmatpush1.bf16.msra.mxu0 %v2246
    %2272 = vmatprep.subr.bf16.mxu0 0
    %2273 = vmatpush1.bf16.msra.mxu0 %v2245
    %2274 = vmatprep.subr.bf16.mxu0 0
    %2275 = vmatpush1.bf16.msra.mxu0 %v2244
    %2276 = vmatprep.subr.bf16.mxu0 0
    %2277 = vmatpush2.bf16.msra.mxu0 0
    %2278 = vmatprep.subr.bf16.mxu0 0
    %2279 = vmatpush2.bf16.msra.mxu0 0
    %2280 = vmatprep.subr.bf16.mxu0 0
    %2281 = vmatpush2.bf16.msra.mxu0 0
    %2282 = vmatprep.subr.bf16.mxu0 0
    %2283 = vmatpush2.bf16.msra.mxu0 0
    %2284 = vmatprep.subr.bf16.mxu0 0
    %2285 = vmatpush2.bf16.msra.mxu0 0
    %2286 = vmatprep.subr.bf16.mxu0 0
    %2287 = vmatpush2.bf16.msra.mxu0 0
    %2288 = vmatprep.subr.bf16.mxu0 0
    %2289 = vmatpush2.bf16.msra.mxu0 0
    %2290 = vmatprep.subr.bf16.mxu0 0
    %2291 = vmatpush2.bf16.msra.mxu0 0
    %2292 = vmatprep.mubr.bf16.mxu0 0
    %2293 = vmatmul.mubr.bf16.gmra.mxu0 %v2183
    %v2294 = vpop.f32.mrf.mxu0
    %v2295 = vadd.f32 0.0, %v2294
    %v2296 = vpop.f32.mrf.mxu0
    %v2297 = vpop.f32.mrf.mxu0
    %v2298 = vadd.f32 0.0, %v2297
    %v2299 = vpop.f32.mrf.mxu0
    %2300 = vmatprep.mubr.bf16.mxu0 0
    %2301 = vmatmul.mubr.bf16.gmra.mxu0 %v2184
    %v2302 = vpop.f32.mrf.mxu0
    %v2303 = vadd.f32 0.0, %v2302
    %v2304 = vpop.f32.mrf.mxu0
    %v2305 = vpop.f32.mrf.mxu0
    %v2306 = vadd.f32 0.0, %v2305
    %v2307 = vpop.f32.mrf.mxu0
    %2308 = vmatprep.mubr.bf16.mxu0 0
    %2309 = vmatmul.mubr.bf16.gmra.mxu0 %v2185
    %v2310 = vpop.f32.mrf.mxu0
    %v2311 = vadd.f32 0.0, %v2310
    %v2312 = vpop.f32.mrf.mxu0
    %v2313 = vpop.f32.mrf.mxu0
    %v2314 = vadd.f32 0.0, %v2313
    %v2315 = vpop.f32.mrf.mxu0
    %2316 = vmatprep.mubr.bf16.mxu0 0
    %2317 = vmatmul.mubr.bf16.gmra.mxu0 %v2186
    %v2318 = vpop.f32.mrf.mxu0
    %v2319 = vadd.f32 0.0, %v2318
    %v2320 = vpop.f32.mrf.mxu0
    %v2321 = vpop.f32.mrf.mxu0
    %v2322 = vadd.f32 0.0, %v2321
    %v2323 = vpop.f32.mrf.mxu0
    %2324 = vmatprep.mubr.bf16.mxu0 0
    %2325 = vmatmul.mubr.bf16.gmra.mxu0 %v2187
    %v2326 = vpop.f32.mrf.mxu0
    %v2327 = vadd.f32 0.0, %v2326
    %v2328 = vpop.f32.mrf.mxu0
    %v2329 = vpop.f32.mrf.mxu0
    %v2330 = vadd.f32 0.0, %v2329
    %v2331 = vpop.f32.mrf.mxu0
    %2332 = vmatprep.mubr.bf16.mxu0 0
    %2333 = vmatmul.mubr.bf16.gmra.mxu0 %v2188
    %v2334 = vpop.f32.mrf.mxu0
    %v2335 = vadd.f32 0.0, %v2334
    %v2336 = vpop.f32.mrf.mxu0
    %v2337 = vpop.f32.mrf.mxu0
    %v2338 = vadd.f32 0.0, %v2337
    %v2339 = vpop.f32.mrf.mxu0
    %2340 = vmatprep.mubr.bf16.mxu0 0
    %2341 = vmatmul.mubr.bf16.gmra.mxu0 %v2189
    %v2342 = vpop.f32.mrf.mxu0
    %v2343 = vadd.f32 0.0, %v2342
    %v2344 = vpop.f32.mrf.mxu0
    %v2345 = vpop.f32.mrf.mxu0
    %v2346 = vadd.f32 0.0, %v2345
    %v2347 = vpop.f32.mrf.mxu0
    %2348 = vmatprep.mubr.bf16.mxu0 0
    %2349 = vmatmul.mubr.bf16.gmra.mxu0 %v2190
    %v2350 = vpop.f32.mrf.mxu0
    %v2351 = vadd.f32 0.0, %v2350
    %v2352 = vpop.f32.mrf.mxu0
    %v2353 = vpop.f32.mrf.mxu0
    %v2354 = vadd.f32 0.0, %v2353
    %v2355 = vpop.f32.mrf.mxu0
    %2356 = vmatprep.mubr.bf16.mxu0 0
    %2357 = vmatmul.mubr.bf16.gmra.mxu0 %v2191
    %v2358 = vpop.f32.mrf.mxu0
    %v2359 = vadd.f32 0.0, %v2358
    %v2360 = vpop.f32.mrf.mxu0
    %v2361 = vpop.f32.mrf.mxu0
    %v2362 = vadd.f32 0.0, %v2361
    %v2363 = vpop.f32.mrf.mxu0
    %2364 = vmatprep.mubr.bf16.mxu0 0
    %2365 = vmatmul.mubr.bf16.gmra.mxu0 %v2192
    %v2366 = vpop.f32.mrf.mxu0
    %v2367 = vadd.f32 0.0, %v2366
    %v2368 = vpop.f32.mrf.mxu0
    %v2369 = vpop.f32.mrf.mxu0
    %v2370 = vadd.f32 0.0, %v2369
    %v2371 = vpop.f32.mrf.mxu0
    %2372 = vmatprep.mubr.bf16.mxu0 0
    %2373 = vmatmul.mubr.bf16.gmra.mxu0 %v2193
    %v2374 = vpop.f32.mrf.mxu0
    %v2375 = vadd.f32 0.0, %v2374
    %v2376 = vpop.f32.mrf.mxu0
    %v2377 = vpop.f32.mrf.mxu0
    %v2378 = vadd.f32 0.0, %v2377
    %v2379 = vpop.f32.mrf.mxu0
    %2380 = vmatprep.mubr.bf16.mxu0 0
    %2381 = vmatmul.mubr.bf16.gmra.mxu0 %v2194
    %v2382 = vpop.f32.mrf.mxu0
    %v2383 = vadd.f32 0.0, %v2382
    %v2384 = vpop.f32.mrf.mxu0
    %v2385 = vpop.f32.mrf.mxu0
    %v2386 = vadd.f32 0.0, %v2385
    %v2387 = vpop.f32.mrf.mxu0
    %2388 = vmatprep.mubr.bf16.mxu0 0
    %2389 = vmatmul.mubr.bf16.gmra.mxu0 %v2195
    %v2390 = vpop.f32.mrf.mxu0
    %v2391 = vadd.f32 0.0, %v2390
    %v2392 = vpop.f32.mrf.mxu0
    %v2393 = vpop.f32.mrf.mxu0
    %v2394 = vpop.f32.mrf.mxu0
    %2395 = vdwg.mxu0
    %v2396 = vadd.f32 %v2133, %v2295
    %v2397 = vadd.f32 %v2134, %v2298
    %v2398 = vadd.f32 %v2135, %v2303
    %v2399 = vadd.f32 %v2136, %v2306
    %v2400 = vadd.f32 %v2137, %v2311
    %v2401 = vadd.f32 %v2138, %v2314
    %v2402 = vadd.f32 %v2139, %v2319
    %v2403 = vadd.f32 %v2140, %v2322
    %v2404 = vadd.f32 %v2141, %v2327
    %v2405 = vadd.f32 %v2142, %v2330
    %v2406 = vadd.f32 %v2143, %v2335
    %v2407 = vadd.f32 %v2144, %v2338
    %v2408 = vadd.f32 %v2145, %v2343
    %v2409 = vadd.f32 %v2146, %v2346
    %v2410 = vadd.f32 %v2147, %v2351
    %v2411 = vadd.f32 %v2148, %v2354
    %v2412 = vadd.f32 %v2149, %v2359
    %v2413 = vadd.f32 %v2150, %v2362
    %v2414 = vadd.f32 %v2151, %v2367
    %v2415 = vadd.f32 %v2152, %v2370
    %v2416 = vadd.f32 %v2153, %v2375
    %v2417 = vadd.f32 %v2154, %v2378
    %v2418 = vadd.f32 %v2155, %v2383
    %v2419 = vadd.f32 %v2156, %v2386
    %v2420 = vadd.f32 %v2157, %v2391
    %v2421 = vld [vmem:[%s3] sm:$0xff]
    %v2422 = vld [vmem:[%s3 + $0x8] sm:$0xff]
    %v2423 = vld [vmem:[%s3 + $0x10] sm:$0xff]
    %v2424 = vld [vmem:[%s3 + $0x18] sm:$0xff]
    %v2425 = vld [vmem:[%s3 + $0x20] sm:$0xff]
    %v2426 = vld [vmem:[%s3 + $0x28] sm:$0xff]
    %v2427 = vld [vmem:[%s3 + $0x30] sm:$0xff]
    %v2428 = vld [vmem:[%s3 + $0x38] sm:$0xff]
    %v2429 = vld [vmem:[%s3 + $0x40] sm:$0xff]
    %v2430 = vld [vmem:[%s3 + $0x48] sm:$0xff]
    %v2431 = vld [vmem:[%s3 + $0x50] sm:$0xff]
    %v2432 = vld [vmem:[%s3 + $0x58] sm:$0xff]
    %v2433 = vld [vmem:[%s3 + $0x60] sm:$0xff]
    %v2434 = vld [vmem:[%s3 + $0x68] sm:$0xff]
    %v2435 = vld [vmem:[%s3 + $0x70] sm:$0xff]
    %v2436 = vld [vmem:[%s3 + $0x78] sm:$0xff]
    %v2437 = vld [vmem:[%s3 + $0x80] sm:$0xff]
    %v2438 = vld [vmem:[%s3 + $0x88] sm:$0xff]
    %v2439 = vld [vmem:[%s3 + $0x90] sm:$0xff]
    %v2440 = vld [vmem:[%s3 + $0x98] sm:$0xff]
    %v2441 = vld [vmem:[%s3 + $0xa0] sm:$0xff]
    %v2442 = vld [vmem:[%s3 + $0xa8] sm:$0xff]
    %v2443 = vld [vmem:[%s3 + $0xb0] sm:$0xff]
    %v2444 = vld [vmem:[%s3 + $0xb8] sm:$0xff]
    %v2445 = vld [vmem:[%s3 + $0xc0] sm:$0xff]
    %2447 = vset.pattern.permute.xlu0 0
    %2448 = vperm.xlu0 %2447, %v2421
    %v2449 = vpop.permute.xlu0 %2448
    %2452 = vset.pattern.permute.xlu0 0
    %2453 = vperm.xlu0 %2452, %v2422
    %v2454 = vpop.permute.xlu0 %2453
    %2457 = vset.pattern.permute.xlu0 0
    %2458 = vperm.xlu0 %2457, %v2423
    %v2459 = vpop.permute.xlu0 %2458
    %2462 = vset.pattern.permute.xlu0 0
    %2463 = vperm.xlu0 %2462, %v2424
    %v2464 = vpop.permute.xlu0 %2463
    %2467 = vset.pattern.permute.xlu0 0
    %2468 = vperm.xlu0 %2467, %v2425
    %v2469 = vpop.permute.xlu0 %2468
    %2472 = vset.pattern.permute.xlu0 0
    %2473 = vperm.xlu0 %2472, %v2426
    %v2474 = vpop.permute.xlu0 %2473
    %2477 = vset.pattern.permute.xlu0 0
    %2478 = vperm.xlu0 %2477, %v2427
    %v2479 = vpop.permute.xlu0 %2478
    %2482 = vset.pattern.permute.xlu0 0
    %2483 = vperm.xlu0 %2482, %v2428
    %v2484 = vpop.permute.xlu0 %2483
    %2487 = vset.pattern.permute.xlu0 0
    %2488 = vperm.xlu0 %2487, %v2429
    %v2489 = vpop.permute.xlu0 %2488
    %2492 = vset.pattern.permute.xlu0 0
    %2493 = vperm.xlu0 %2492, %v2430
    %v2494 = vpop.permute.xlu0 %2493
    %2497 = vset.pattern.permute.xlu0 0
    %2498 = vperm.xlu0 %2497, %v2431
    %v2499 = vpop.permute.xlu0 %2498
    %2502 = vset.pattern.permute.xlu0 0
    %2503 = vperm.xlu0 %2502, %v2432
    %v2504 = vpop.permute.xlu0 %2503
    %2507 = vset.pattern.permute.xlu0 0
    %2508 = vperm.xlu0 %2507, %v2433
    %v2509 = vpop.permute.xlu0 %2508
    %2512 = vset.pattern.permute.xlu0 0
    %2513 = vperm.xlu0 %2512, %v2434
    %v2514 = vpop.permute.xlu0 %2513
    %2517 = vset.pattern.permute.xlu0 0
    %2518 = vperm.xlu0 %2517, %v2435
    %v2519 = vpop.permute.xlu0 %2518
    %2522 = vset.pattern.permute.xlu0 0
    %2523 = vperm.xlu0 %2522, %v2436
    %v2524 = vpop.permute.xlu0 %2523
    %2527 = vset.pattern.permute.xlu0 0
    %2528 = vperm.xlu0 %2527, %v2437
    %v2529 = vpop.permute.xlu0 %2528
    %2532 = vset.pattern.permute.xlu0 0
    %2533 = vperm.xlu0 %2532, %v2438
    %v2534 = vpop.permute.xlu0 %2533
    %2537 = vset.pattern.permute.xlu0 0
    %2538 = vperm.xlu0 %2537, %v2439
    %v2539 = vpop.permute.xlu0 %2538
    %2542 = vset.pattern.permute.xlu0 0
    %2543 = vperm.xlu0 %2542, %v2440
    %v2544 = vpop.permute.xlu0 %2543
    %2547 = vset.pattern.permute.xlu0 0
    %2548 = vperm.xlu0 %2547, %v2441
    %v2549 = vpop.permute.xlu0 %2548
    %2552 = vset.pattern.permute.xlu0 0
    %2553 = vperm.xlu0 %2552, %v2442
    %v2554 = vpop.permute.xlu0 %2553
    %2557 = vset.pattern.permute.xlu0 0
    %2558 = vperm.xlu0 %2557, %v2443
    %v2559 = vpop.permute.xlu0 %2558
    %2562 = vset.pattern.permute.xlu0 0
    %2563 = vperm.xlu0 %2562, %v2444
    %v2564 = vpop.permute.xlu0 %2563
    %2567 = vset.pattern.permute.xlu0 0
    %2568 = vperm.xlu0 %2567, %v2445
    %v2569 = vpop.permute.xlu0 %2568
    %v2571 = vmul.f32 %v2396, %v2449
    %v2572 = vmul.f32 %v2397, %v2454
    %v2573 = vmul.f32 %v2398, %v2459
    %v2574 = vmul.f32 %v2399, %v2464
    %v2575 = vmul.f32 %v2400, %v2469
    %v2576 = vmul.f32 %v2401, %v2474
    %v2577 = vmul.f32 %v2402, %v2479
    %v2578 = vmul.f32 %v2403, %v2484
    %v2579 = vmul.f32 %v2404, %v2489
    %v2580 = vmul.f32 %v2405, %v2494
    %v2581 = vmul.f32 %v2406, %v2499
    %v2582 = vmul.f32 %v2407, %v2504
    %v2583 = vmul.f32 %v2408, %v2509
    %v2584 = vmul.f32 %v2409, %v2514
    %v2585 = vmul.f32 %v2410, %v2519
    %v2586 = vmul.f32 %v2411, %v2524
    %v2587 = vmul.f32 %v2412, %v2529
    %v2588 = vmul.f32 %v2413, %v2534
    %v2589 = vmul.f32 %v2414, %v2539
    %v2590 = vmul.f32 %v2415, %v2544
    %v2591 = vmul.f32 %v2416, %v2549
    %v2592 = vmul.f32 %v2417, %v2554
    %v2593 = vmul.f32 %v2418, %v2559
    %v2594 = vmul.f32 %v2419, %v2564
    %v2595 = vmul.f32 %v2420, %v2569
    %2596 = vst [vmem:[#allocation7] sm:$0xff] %v2571
    %2597 = vst [vmem:[#allocation7 + $0x8] sm:$0xff] %v2572
    %2598 = vst [vmem:[#allocation7 + $0x10] sm:$0xff] %v2573
    %2599 = vst [vmem:[#allocation7 + $0x18] sm:$0xff] %v2574
    %2600 = vst [vmem:[#allocation7 + $0x20] sm:$0xff] %v2575
    %2601 = vst [vmem:[#allocation7 + $0x28] sm:$0xff] %v2576
    %2602 = vst [vmem:[#allocation7 + $0x30] sm:$0xff] %v2577
    %2603 = vst [vmem:[#allocation7 + $0x38] sm:$0xff] %v2578
    %2604 = vst [vmem:[#allocation7 + $0x40] sm:$0xff] %v2579
    %2605 = vst [vmem:[#allocation7 + $0x48] sm:$0xff] %v2580
    %2606 = vst [vmem:[#allocation7 + $0x50] sm:$0xff] %v2581
    %2607 = vst [vmem:[#allocation7 + $0x58] sm:$0xff] %v2582
    %2608 = vst [vmem:[#allocation7 + $0x60] sm:$0xff] %v2583
    %2609 = vst [vmem:[#allocation7 + $0x68] sm:$0xff] %v2584
    %2610 = vst [vmem:[#allocation7 + $0x70] sm:$0xff] %v2585
    %2611 = vst [vmem:[#allocation7 + $0x78] sm:$0xff] %v2586
    %2612 = vst [vmem:[#allocation7 + $0x80] sm:$0xff] %v2587
    %2613 = vst [vmem:[#allocation7 + $0x88] sm:$0xff] %v2588
    %2614 = vst [vmem:[#allocation7 + $0x90] sm:$0xff] %v2589
    %2615 = vst [vmem:[#allocation7 + $0x98] sm:$0xff] %v2590
    %2616 = vst [vmem:[#allocation7 + $0xa0] sm:$0xff] %v2591
    %2617 = vst [vmem:[#allocation7 + $0xa8] sm:$0xff] %v2592
    %2618 = vst [vmem:[#allocation7 + $0xb0] sm:$0xff] %v2593
    %2619 = vst [vmem:[#allocation7 + $0xb8] sm:$0xff] %v2594
    %2620 = vst [vmem:[#allocation7 + $0xc0] sm:$0xff] %v2595
    // Predicated region
    $region26: #{tpu_custom_call.1} parent=1 // pred_check
      _
    $region27: #{tpu_custom_call.1} parent=1 // pred_check_branch
      %2622 = sbr.rel (0) target = $region29
    $region28: #{tpu_custom_call.1} parent=1 // pred_region
      %s2624 = ssub.s32 3200, 3200
      %2625 = vsyncadd [#allocation4], %s2624
      %s2626 = sshll.u32 [#allocation7], 4
      %s2627 = int_to_ptr.vmem [resolvable:$true] %s2626
      %2632 = dma.vmem_to_hbm [thread:$0]  %s2627, 3200, %s4, [#allocation4], 128, 128, 8
    $region29: #{tpu_custom_call.1} parent=1 // pred_fallthru
      _
    // Predicated region
    $region30: #{tpu_custom_call.1} parent=1 // pred_check
      _
    $region31: #{tpu_custom_call.1} parent=1 // pred_check_branch
      %2634 = sbr.rel (0) target = $region33
    $region32: #{tpu_custom_call.1} parent=1 // pred_region
      %2635 = dma.done [#allocation4], 3200
    $region33: #{tpu_custom_call.1} parent=1 // pred_fallthru
      _
    %2636 = vsyncpa [#allocation3], 1
    %2637 = vsyncpa [#allocation6], 1
    %2638 = vsyncpa [#allocation4], 1

</llo_original>
